<compile_context>
chip_gen: v7x
topology: tpu7x:2x2x1
jax: 0.10.0
libtpu: 0.0.40
codegen_flags: <defaults>
</compile_context>

<pallas_src>
import jax
import jax.numpy as jnp
from jax.experimental import pallas as pl
from jax.experimental.pallas import tpu as pltpu


def _round_up(n, m):
    return (n + m - 1) // m * m


def _num_tensorcores_per_chip():
    """Best-effort TensorCore count per chip (v7x/v4 megacore = 2, v5e/v6e = 1)."""
    try:
        kind = jax.devices()[0].device_kind.lower()
    except Exception:
        return 1
    return 2 if ("v7" in kind or "v4" in kind) else 1


def _pick_batch_tile(batch):
    # Single-TC chips: one big tile (halves fixed grid overhead, fills MXU rows).
    # Dual-TC chips: >=2 parallel 128-row tiles so both cores get work.
    if _num_tensorcores_per_chip() >= 2 and batch >= 2 * 128:
        return 128
    return max(8, _round_up(batch, 8))


# ---------------------------------------------------------------------------
# Kernel: one grid step = one timestep for one batch tile.
#   grid = (n_batch_tiles ["parallel"], T ["arbitrary"])
# ---------------------------------------------------------------------------
def rnn_seq_kernel(x_ref, h0_ref, wx_ref, wh_ref, b_in_ref, wy_ref, by_ref,
                   h_out_ref, y_ref, h_carry):
    t = pl.program_id(1)

    @pl.when(t == 0)
    def _():
        # (Re)load the initial hidden state for this batch tile.
        h_carry[...] = h0_ref[...].astype(jnp.float32)

    # Two accumulating MXU dots (bf16 inputs, f32 accumulation); no [x|h] concat.
    x = x_ref[...].astype(wx_ref.dtype)
    h_prev = h_carry[...].astype(wh_ref.dtype)
    pre = (jnp.dot(x, wx_ref[...], preferred_element_type=jnp.float32)
           + jnp.dot(h_prev, wh_ref[...], preferred_element_type=jnp.float32)
           + b_in_ref[...])
    h_new = jnp.tanh(pre)                       # f32 EUP tanh (v5e-safe)
    h_carry[...] = h_new                        # recurrent carry stays f32 in VMEM

    y = (jnp.dot(h_new.astype(wy_ref.dtype), wy_ref[...],
                 preferred_element_type=jnp.float32) + by_ref[...])
    y_ref[...] = y.astype(y_ref.dtype)          # lane-dense (D_in padded to 128)

    @pl.when(t == pl.num_programs(1) - 1)
    def _():
        h_out_ref[...] = h_new.astype(h_out_ref.dtype)


# ---------------------------------------------------------------------------
# One-time weight preparation (hoisted out of the per-step / per-sequence path).
# ---------------------------------------------------------------------------
def prepare_params(params, input_dim, compute_dtype=jnp.bfloat16):
    wx_t, bx, wh_t, bh, wy_t, by = params
    D_in = input_dim
    D_h = wh_t.shape[0]
    if D_h % 128:
        # TODO(synk): lane-pad hidden_dim as well for non-multiple-of-128 D_h.
        raise ValueError("hidden_dim must be a multiple of 128")
    D_in_p = _round_up(D_in, 128)               # lane-dense x / Wy / y

    wx_p = jnp.zeros((D_in_p, D_h), compute_dtype).at[:D_in].set(
        wx_t.astype(compute_dtype))                                   # (D_in_p, D_h)
    wh = wh_t.astype(compute_dtype)                                    # (D_h,   D_h)
    b_in = (bx + bh).astype(jnp.float32).reshape(1, D_h)               # bx + bh folded
    wy_p = jnp.zeros((D_h, D_in_p), compute_dtype).at[:, :D_in].set(
        wy_t.astype(compute_dtype))                                    # (D_h, D_in_p)
    by_p = jnp.zeros((1, D_in_p), jnp.float32).at[:, :D_in].set(
        by.reshape(1, D_in).astype(jnp.float32))                       # (1,  D_in_p)

    return dict(wx=wx_p, wh=wh, b_in=b_in, wy=wy_p, by=by_p,
                d_in=D_in, d_in_p=D_in_p, d_h=D_h)


# ---------------------------------------------------------------------------
# Fused sequence: one pallas_call for T steps (weights resident, h in VMEM).
# ---------------------------------------------------------------------------
def simple_rnn_sequence(x_seq, h0, prepared, *, batch_tile=None):
    """x_seq: (T, B, D_in), h0: (B, D_h) -> (h_final (B, D_h), y_seq (T, B, D_in))."""
    T, B, D_in = x_seq.shape
    assert D_in == prepared["d_in"]
    D_h, D_in_p = prepared["d_h"], prepared["d_in_p"]
    out_dtype = x_seq.dtype
    cdt = prepared["wx"].dtype

    if batch_tile is None:
        batch_tile = _pick_batch_tile(B)
    B_p = _round_up(B, batch_tile)

    # Pad + cast x once for the whole sequence (single fused XLA op); skip if trivial.
    if (B_p, D_in_p) == (B, D_in) and x_seq.dtype == cdt:
        x_p = x_seq
    else:
        x_p = jnp.zeros((T, B_p, D_in_p), cdt).at[:, :B, :D_in].set(
            x_seq.astype(cdt))
    h0_p = h0 if B_p == B else jnp.zeros((B_p, D_h), h0.dtype).at[:B].set(h0)

    streamed = lambda feat: pl.BlockSpec((None, batch_tile, feat),
                                         lambda b, t: (t, b, 0))
    per_tile = lambda feat: pl.BlockSpec((batch_tile, feat), lambda b, t: (b, 0))
    resident = lambda shape: pl.BlockSpec(shape, lambda b, t: (0, 0))

    nbytes = lambda a: a.size * a.dtype.itemsize
    w_bytes = sum(nbytes(prepared[k]) for k in ("wx", "wh", "b_in", "wy", "by"))
    out_isz = jnp.dtype(out_dtype).itemsize
    cost = pl.CostEstimate(
        flops=2 * T * B_p * (D_in_p * D_h + D_h * D_h + D_h * D_in_p),
        transcendentals=T * B_p * D_h,
        bytes_accessed=(nbytes(x_p) + nbytes(h0_p) + w_bytes
                        + T * B_p * D_in_p * out_isz + B_p * D_h * out_isz))

    h_final, y_seq_p = pl.pallas_call(
        rnn_seq_kernel,
        out_shape=(jax.ShapeDtypeStruct((B_p, D_h), out_dtype),
                   jax.ShapeDtypeStruct((T, B_p, D_in_p), out_dtype)),
        grid_spec=pltpu.PrefetchScalarGridSpec(
            num_scalar_prefetch=0,
            grid=(B_p // batch_tile, T),
            in_specs=[
                streamed(D_in_p),             # x_t           (bf16, lane-padded)
                per_tile(D_h),                # h0            (per batch tile)
                resident((D_in_p, D_h)),      # Wx^T          (bf16)
                resident((D_h, D_h)),         # Wh^T          (bf16)
                resident((1, D_h)),           # b_x + b_h     (f32)
                resident((D_h, D_in_p)),      # Wy^T          (bf16, lane-padded)
                resident((1, D_in_p)),        # b_y           (f32, lane-padded)
            ],
            out_specs=[
                per_tile(D_h),                # h_final (written at t == T-1)
                streamed(D_in_p),             # y_t     (lane-dense vst)
            ],
            scratch_shapes=[pltpu.VMEM((batch_tile, D_h), jnp.float32)],
        ),
        compiler_params=pltpu.CompilerParams(
            dimension_semantics=("parallel", "arbitrary")),
        cost_estimate=cost,
    )(x_p, h0_p, prepared["wx"], prepared["wh"], prepared["b_in"],
      prepared["wy"], prepared["by"])

    return h_final[:B], y_seq_p[:, :B, :D_in]


def simple_rnn_cell(x, h, prepared, **kw):
    """Single cell step (T=1 case of the fused kernel).  x: (B, D_in), h: (B, D_h)."""
    h_new, y_seq = simple_rnn_sequence(x[None], h, prepared, **kw)
    return h_new, y_seq[0]


# ---------------------------------------------------------------------------
# Parameters + pure-JAX reference.
# ---------------------------------------------------------------------------
def init_params(key, hidden_dim, input_dim, dtype=jnp.float32):
    """Deterministic synthetic parameters (PyTorch nn.Linear-style scaling)."""
    ks = jax.random.split(key, 6)
    def lin(kw, kb, fan_in, fan_out):
        bound = 1.0 / jnp.sqrt(fan_in)
        w = jax.random.uniform(kw, (fan_in, fan_out), dtype, -bound, bound)  # = W^T
        b = jax.random.uniform(kb, (1, fan_out), dtype, -bound, bound)
        return w, b
    wx_t, bx = lin(ks[0], ks[1], input_dim, hidden_dim)    # Wx: in -> hidden
    wh_t, bh = lin(ks[2], ks[3], hidden_dim, hidden_dim)   # Wh: hidden -> hidden
    wy_t, by = lin(ks[4], ks[5], hidden_dim, input_dim)    # Wy: hidden -> in
    return (wx_t, bx, wh_t, bh, wy_t, by)


def reference(x_seq, h0, params):
    wx_t, bx, wh_t, bh, wy_t, by = params
    def step(h, x):
        h_new = jnp.tanh(x @ wx_t + bx + h @ wh_t + bh)
        y = h_new @ wy_t + by
        return h_new, y
    h_final, ys = jax.lax.scan(step, h0, x_seq)
    return h_final, ys


if __name__ == "__main__":
    # Small but MXU/lane-friendly shapes; 8 timesteps exercise the recurrence.
    B, D_IN, D_H, T = 256, 64, 128, 8

    key = jax.random.PRNGKey(0)
    k_x, k_p = jax.random.split(key)
    x_seq = jax.random.normal(k_x, (T, B, D_IN), jnp.float32)
    h0 = jnp.zeros((B, D_H), jnp.float32)          # init_hidden(): zero hidden state
    params = init_params(k_p, D_H, D_IN)

    prepared = prepare_params(params, D_IN)        # one-time weight prep (hoisted)

    # Fused sequence: one pallas_call for all T steps.
    h_fin, y_seq = simple_rnn_sequence(x_seq, h0, prepared)
    # Single-step cell path (same kernel, T=1).
    h1, y1 = simple_rnn_cell(x_seq[0], h0, prepared)
    jax.block_until_ready((h_fin, y_seq, h1, y1))

    assert h_fin.shape == (B, D_H) and y_seq.shape == (T, B, D_IN)
    assert h1.shape == (B, D_H) and y1.shape == (B, D_IN)

    # Reference A: same bf16-quantized weights in f32 math (isolates kernel logic,
    # validates long-sequence drift). Reference B: full-f32 weights (looser: the
    # delta is the deliberate bf16 weight quantization).
    bf = lambda w: w.astype(jnp.bfloat16).astype(jnp.float32)
    wx_t, bx, wh_t, bh, wy_t, by = params
    params_q = (bf(wx_t), bx, bf(wh_t), bh, bf(wy_t), by)

    hq, yq = reference(x_seq, h0, params_q)
    hf, yf = reference(x_seq, h0, params)
    h1q, y1q = reference(x_seq[:1], h0, params_q)

    tight = dict(atol=4e-2, rtol=4e-2)
    loose = dict(atol=1e-1, rtol=1e-1)
    assert jnp.allclose(h_fin, hq, **tight)
    assert jnp.allclose(y_seq, yq, **tight)
    assert jnp.allclose(h_fin, hf, **loose)
    assert jnp.allclose(y_seq, yf, **loose)
    assert jnp.allclose(h1, h1q, **tight)
    assert jnp.allclose(y1, y1q[0], **tight)

    print("KERNEL_OK")
</pallas_src>

<mosaic_0001>
module attributes {stable_mosaic.version = 11 : i64} {
  func.func @rnn_seq_kernel(%arg0: i32, %arg1: i32, %arg2: memref<1x256x128xbf16, #tpu.memory_space<vmem>>, %arg3: memref<256x128xf32, #tpu.memory_space<vmem>>, %arg4: memref<128x128xbf16, #tpu.memory_space<vmem>>, %arg5: memref<128x128xbf16, #tpu.memory_space<vmem>>, %arg6: memref<1x128xf32, #tpu.memory_space<vmem>>, %arg7: memref<128x128xbf16, #tpu.memory_space<vmem>>, %arg8: memref<1x128xf32, #tpu.memory_space<vmem>>, %arg9: memref<256x128xf32, #tpu.memory_space<vmem>>, %arg10: memref<1x256x128xf32, #tpu.memory_space<vmem>>, %arg11: memref<256x128xf32, #tpu.memory_space<vmem>>) attributes {dimension_semantics = [#tpu.dimension_semantics<parallel>, #tpu.dimension_semantics<arbitrary>], iteration_bounds = array<i64: 1, 8>, scalar_prefetch = 0 : i64, scratch_operands = 1 : i64, tpu.core_type = #tpu.core_type<tc>, window_params = [{transform_indices = @transform_0, window_bounds = array<i64: 1, 256, 128>}, {transform_indices = @transform_1, window_bounds = array<i64: 256, 128>}, {pipeline_mode = #tpu.pipeline_mode<synchronous>, transform_indices = @transform_2, window_bounds = array<i64: 128, 128>}, {pipeline_mode = #tpu.pipeline_mode<synchronous>, transform_indices = @transform_3, window_bounds = array<i64: 128, 128>}, {pipeline_mode = #tpu.pipeline_mode<synchronous>, transform_indices = @transform_4, window_bounds = array<i64: 1, 128>}, {pipeline_mode = #tpu.pipeline_mode<synchronous>, transform_indices = @transform_5, window_bounds = array<i64: 128, 128>}, {pipeline_mode = #tpu.pipeline_mode<synchronous>, transform_indices = @transform_6, window_bounds = array<i64: 1, 128>}, {transform_indices = @transform_7, window_bounds = array<i64: 256, 128>}, {transform_indices = @transform_8, window_bounds = array<i64: 1, 256, 128>}]} {
    %c0_i32 = arith.constant 0 : i32
    %0 = arith.cmpi eq, %arg1, %c0_i32 : i32
    %1 = arith.extui %0 : i1 to i32
    %c0_i32_0 = arith.constant 0 : i32
    %2 = arith.cmpi ne, %1, %c0_i32_0 : i32
    scf.if %2 {
      %c0_23 = arith.constant 0 : index
      %c0_24 = arith.constant 0 : index
      %29 = vector.load %arg3[%c0_23, %c0_24] : memref<256x128xf32, #tpu.memory_space<vmem>>, vector<256x128xf32>
      %c0_25 = arith.constant 0 : index
      %c0_26 = arith.constant 0 : index
      %30 = vector.load %arg11[%c0_25, %c0_26] : memref<256x128xf32, #tpu.memory_space<vmem>>, vector<256x128xf32>
      tpu.vector_store %arg11[%c0_25, %c0_26], %29 {strides = array<i32>} : memref<256x128xf32, #tpu.memory_space<vmem>>, vector<256x128xf32>,
    } else {
    }
    %c0 = arith.constant 0 : index
    %c0_1 = arith.constant 0 : index
    %c0_2 = arith.constant 0 : index
    %3 = vector.load %arg2[%c0, %c0_1, %c0_2] : memref<1x256x128xbf16, #tpu.memory_space<vmem>>, vector<1x256x128xbf16>
    %4 = vector.shape_cast %3 : vector<1x256x128xbf16> to vector<256x128xbf16>
    %c0_3 = arith.constant 0 : index
    %c0_4 = arith.constant 0 : index
    %5 = vector.load %arg11[%c0_3, %c0_4] : memref<256x128xf32, #tpu.memory_space<vmem>>, vector<256x128xf32>
    %6 = arith.truncf %5 : vector<256x128xf32> to vector<256x128xbf16>
    %c0_5 = arith.constant 0 : index
    %c0_6 = arith.constant 0 : index
    %7 = vector.load %arg4[%c0_5, %c0_6] : memref<128x128xbf16, #tpu.memory_space<vmem>>, vector<128x128xbf16>
    %cst = arith.constant dense<0.000000e+00> : vector<256x128xf32>
    %8 = tpu.matmul %4, %7, %cst {dimension_numbers = #tpu.dot_dimension_numbers<[1], [0], [0], [1], [0, 0, 1, 1], [], []>} : vector<256x128xbf16>, vector<128x128xbf16>, vector<256x128xf32> -> vector<256x128xf32>
    %c0_7 = arith.constant 0 : index
    %c0_8 = arith.constant 0 : index
    %9 = vector.load %arg5[%c0_7, %c0_8] : memref<128x128xbf16, #tpu.memory_space<vmem>>, vector<128x128xbf16>
    %cst_9 = arith.constant dense<0.000000e+00> : vector<256x128xf32>
    %10 = tpu.matmul %6, %9, %cst_9 {dimension_numbers = #tpu.dot_dimension_numbers<[1], [0], [0], [1], [0, 0, 1, 1], [], []>} : vector<256x128xbf16>, vector<128x128xbf16>, vector<256x128xf32> -> vector<256x128xf32>
    %11 = arith.addf %8, %10 : vector<256x128xf32>
    %c0_10 = arith.constant 0 : index
    %c0_11 = arith.constant 0 : index
    %12 = vector.load %arg6[%c0_10, %c0_11] : memref<1x128xf32, #tpu.memory_space<vmem>>, vector<1x128xf32>
    %13 = vector.broadcast %12 : vector<1x128xf32> to vector<256x128xf32>
    %14 = arith.addf %11, %13 : vector<256x128xf32>
    %15 = math.tanh %14 : vector<256x128xf32>
    %c0_12 = arith.constant 0 : index
    %c0_13 = arith.constant 0 : index
    %16 = vector.load %arg11[%c0_12, %c0_13] : memref<256x128xf32, #tpu.memory_space<vmem>>, vector<256x128xf32>
    tpu.vector_store %arg11[%c0_12, %c0_13], %15 {strides = array<i32>} : memref<256x128xf32, #tpu.memory_space<vmem>>, vector<256x128xf32>,
    %17 = arith.truncf %15 : vector<256x128xf32> to vector<256x128xbf16>
    %c0_14 = arith.constant 0 : index
    %c0_15 = arith.constant 0 : index
    %18 = vector.load %arg7[%c0_14, %c0_15] : memref<128x128xbf16, #tpu.memory_space<vmem>>, vector<128x128xbf16>
    %cst_16 = arith.constant dense<0.000000e+00> : vector<256x128xf32>
    %19 = tpu.matmul %17, %18, %cst_16 {dimension_numbers = #tpu.dot_dimension_numbers<[1], [0], [0], [1], [0, 0, 1, 1], [], []>} : vector<256x128xbf16>, vector<128x128xbf16>, vector<256x128xf32> -> vector<256x128xf32>
    %c0_17 = arith.constant 0 : index
    %c0_18 = arith.constant 0 : index
    %20 = vector.load %arg8[%c0_17, %c0_18] : memref<1x128xf32, #tpu.memory_space<vmem>>, vector<1x128xf32>
    %21 = vector.broadcast %20 : vector<1x128xf32> to vector<256x128xf32>
    %22 = arith.addf %19, %21 : vector<256x128xf32>
    %c0_19 = arith.constant 0 : index
    %c0_20 = arith.constant 0 : index
    %c0_21 = arith.constant 0 : index
    %23 = vector.load %arg10[%c0_19, %c0_20, %c0_21] : memref<1x256x128xf32, #tpu.memory_space<vmem>>, vector<1x256x128xf32>
    %24 = vector.shape_cast %23 : vector<1x256x128xf32> to vector<256x128xf32>
    %25 = vector.shape_cast %22 : vector<256x128xf32> to vector<1x256x128xf32>
    tpu.vector_store %arg10[%c0_19, %c0_20, %c0_21], %25 {strides = array<i32>} : memref<1x256x128xf32, #tpu.memory_space<vmem>>, vector<1x256x128xf32>,
    %c7_i32 = arith.constant 7 : i32
    %26 = arith.cmpi eq, %arg1, %c7_i32 : i32
    %27 = arith.extui %26 : i1 to i32
    %c0_i32_22 = arith.constant 0 : i32
    %28 = arith.cmpi ne, %27, %c0_i32_22 : i32
    scf.if %28 {
      %c0_23 = arith.constant 0 : index
      %c0_24 = arith.constant 0 : index
      %29 = vector.load %arg9[%c0_23, %c0_24] : memref<256x128xf32, #tpu.memory_space<vmem>>, vector<256x128xf32>
      tpu.vector_store %arg9[%c0_23, %c0_24], %15 {strides = array<i32>} : memref<256x128xf32, #tpu.memory_space<vmem>>, vector<256x128xf32>,
    } else {
    }
    return
  }
  func.func @transform_0(%arg0: i32, %arg1: i32) -> (i32, i32, i32) {
    %c0_i32 = arith.constant 0 : i32
    %c0_i32_0 = arith.constant 0 : i32
    return %arg1, %arg0, %c0_i32 : i32, i32, i32
  }
  func.func @transform_1(%arg0: i32, %arg1: i32) -> (i32, i32) {
    %c0_i32 = arith.constant 0 : i32
    %c0_i32_0 = arith.constant 0 : i32
    return %arg0, %c0_i32 : i32, i32
  }
  func.func @transform_2(%arg0: i32, %arg1: i32) -> (i32, i32) {
    %c0_i32 = arith.constant 0 : i32
    %c0_i32_0 = arith.constant 0 : i32
    %c0_i32_1 = arith.constant 0 : i32
    return %c0_i32, %c0_i32_0 : i32, i32
  }
  func.func @transform_3(%arg0: i32, %arg1: i32) -> (i32, i32) {
    %c0_i32 = arith.constant 0 : i32
    %c0_i32_0 = arith.constant 0 : i32
    %c0_i32_1 = arith.constant 0 : i32
    return %c0_i32, %c0_i32_0 : i32, i32
  }
  func.func @transform_4(%arg0: i32, %arg1: i32) -> (i32, i32) {
    %c0_i32 = arith.constant 0 : i32
    %c0_i32_0 = arith.constant 0 : i32
    %c0_i32_1 = arith.constant 0 : i32
    return %c0_i32, %c0_i32_0 : i32, i32
  }
  func.func @transform_5(%arg0: i32, %arg1: i32) -> (i32, i32) {
    %c0_i32 = arith.constant 0 : i32
    %c0_i32_0 = arith.constant 0 : i32
    %c0_i32_1 = arith.constant 0 : i32
    return %c0_i32, %c0_i32_0 : i32, i32
  }
  func.func @transform_6(%arg0: i32, %arg1: i32) -> (i32, i32) {
    %c0_i32 = arith.constant 0 : i32
    %c0_i32_0 = arith.constant 0 : i32
    %c0_i32_1 = arith.constant 0 : i32
    return %c0_i32, %c0_i32_0 : i32, i32
  }
  func.func @transform_7(%arg0: i32, %arg1: i32) -> (i32, i32) {
    %c0_i32 = arith.constant 0 : i32
    %c0_i32_0 = arith.constant 0 : i32
    return %arg0, %c0_i32 : i32, i32
  }
  func.func @transform_8(%arg0: i32, %arg1: i32) -> (i32, i32, i32) {
    %c0_i32 = arith.constant 0 : i32
    %c0_i32_0 = arith.constant 0 : i32
    return %arg1, %arg0, %c0_i32 : i32, i32, i32
  }
}

</mosaic_0001>

<llo_original>
// kernel: tpu_custom_call.1
$region0: #{tpu_custom_call.1}
  #allocation0 [shape = 'u32[]', space=smem, size = 0x4, offset = 0x4, fixed_abs, tag = 'smem constant byte address 0x4 - core index']
  #allocation1 [shape = 'u32[144,128]{1,0:T(1,128)}', space=vmem, size = 0x12000, scoped, tag = 'internal scratch']
  #allocation2 [shape = 'f32[256,128]{1,0:T(8,128)}', space=vmem, size = 0x20000, scoped, tag = 'scratch operand']
  %s0 = inlined_call_operand.hbm [shape: bf16[8,256,128], index: 0, kind: input, shape index: {}]
  %s1 = inlined_call_operand.hbm [shape: f32[256,128], index: 1, kind: input, shape index: {}]
  %s2 = inlined_call_operand.hbm [shape: bf16[128,128], index: 2, kind: input, shape index: {}]
  %s3 = inlined_call_operand.hbm [shape: bf16[128,128], index: 3, kind: input, shape index: {}]
  %s4 = inlined_call_operand.vmem [shape: f32[1,128], index: 4, kind: input, shape index: {}]
  %s5 = inlined_call_operand.hbm [shape: bf16[128,128], index: 5, kind: input, shape index: {}]
  %s6 = inlined_call_operand.vmem [shape: f32[1,128], index: 6, kind: input, shape index: {}]
  %s7 = inlined_call_operand.hbm [shape: f32[256,128], index: 7, kind: output, shape index: {0}]
  %s8 = inlined_call_operand.hbm [shape: f32[8,256,128], index: 8, kind: output, shape index: {1}]
  %9 = xla_tuple %s7, %s8
  %s10 = sld [smem:[#allocation0]]
  $region97: #{tpu_custom_call.1} parent=0
    _
  %s12 = ssub.s32 1, %s10
  %s13 = scalar_select 0, %s12, %s10
  $region1: #{tpu_custom_call.1} parent=0
    #allocation3 [shape = 'u8[131072]{0}', space=vmem, size = 0x20000, scoped, tag = 'input window, operand 0']
    #allocation4 [shape = 's32[2]{0}', space=sflag, size = 0x8, scoped, tag = 'scoped memory for tpu_custom_call.1']
    #allocation5 [shape = 's32[2]{0}', space=sflag, size = 0x8, scoped, tag = 'scoped memory for tpu_custom_call.1']
    #allocation6 [shape = 'u8[131072]{0}', space=vmem, size = 0x20000, scoped, tag = 'input window, operand 1, single buffered']
    #allocation7 [shape = 's32[1]{0}', space=sflag, size = 0x4, scoped, tag = 'scoped memory for tpu_custom_call.1']
    #allocation8 [shape = 'u8[32768]{0}', space=vmem, size = 0x8000, scoped, tag = 'input window, operand 2, single buffered']
    #allocation9 [shape = 'u8[32768]{0}', space=vmem, size = 0x8000, scoped, tag = 'input window, operand 3, single buffered']
    #allocation10 [shape = 's32[1]{0}', space=sflag, size = 0x4, scoped, tag = 'scoped memory for tpu_custom_call.1']
    #allocation11 [shape = 'u8[32768]{0}', space=vmem, size = 0x8000, scoped, tag = 'input window, operand 5, single buffered']
    #allocation12 [shape = 'u8[131072]{0}', space=vmem, size = 0x20000, scoped, tag = 'output window, operand 0, single buffered']
    #allocation13 [shape = 'u8[262144]{0}', space=vmem, size = 0x40000, scoped, tag = 'output window, operand 1']
    #allocation14 [shape = 's32[2]{0}', space=sflag, size = 0x8, scoped, tag = 'scoped memory for tpu_custom_call.1']
    %14 = vsyncpa [#allocation4], 0
    %s15 = scalar_lea.sflag [#allocation4], 1
    %16 = vsyncpa %s15, 0
    %17 = vsyncpa [#allocation7], 0
    %18 = vsyncpa [#allocation10], 0
    %19 = vsyncpa [#allocation5], 0
    %20 = vsyncpa [#allocation14], 0
    %s21 = scalar_lea.sflag [#allocation14], 1
    %22 = vsyncpa %s21, 0
    loop: start=0, step=1, limit=10
    $region2: #{tpu_custom_call.1} parent=1 // loop_pre_header
      _
    $region3: #{tpu_custom_call.1} parent=1 // loop_header
      %s24 = sphi 0, %s28
      %p25 = scmp.ge.s32.totalorder %s24, 10
      %s31 = sphi 0, %s43
      %s32 = sphi 0, %s39
      %s33 = sphi 0, %s31
      %s34 = sphi 0, %s32
      %s35 = sphi 0, %s33
      %s36 = sphi 0, %s34
      %s48 = sphi 0, %s50
      %s51 = sphi 0, %s48
      %s52 = sphi 0, %s51
      %s68 = sphi 0, %s52
      %s74 = sphi 0, %s76
      %s77 = sphi 0, %s74
      %s78 = sphi 0, %s77
      %s94 = sphi 0, %s78
      %s98 = sphi 0, %s98
      %s100 = sphi 0, %s98
      %s101 = sphi 0, %s100
      %s115 = sphi 0, %s101
      %s119 = sphi 0, %s119
      %s121 = sphi 0, %s119
      %s122 = sphi 0, %s121
      %s136 = sphi 0, %s122
      %s140 = sphi 0, %s140
      %s142 = sphi 0, %s140
      %s143 = sphi 0, %s142
      %s157 = sphi 0, %s143
      %s161 = sphi 0, %s161
      %s163 = sphi 0, %s161
      %s164 = sphi 0, %s163
      %s178 = sphi 0, %s164
      %s182 = sphi 0, %s182
      %s184 = sphi 0, %s182
      %s185 = sphi 0, %s184
      %s199 = sphi 0, %s185
      %s205 = sphi 0, %s207
      %s208 = sphi 0, %s205
      %s209 = sphi 0, %s208
      %s225 = sphi 0, %s209
      %s233 = sphi 0, %s235
      %s236 = sphi 0, %s233
      %s237 = sphi 0, %s236
      %s253 = sphi 0, %s237
    $region4: #{tpu_custom_call.1} parent=1 // loop_header_branch
      %27 = sbr.rel (%p25) target = $region8
    $region5: #{tpu_custom_call.1} parent=1 // loop_body
      %s29 = ssub.s32 %s24, 1
      %s30 = ssub.s32 %s24, 2
      %s37 = sadd.s32 1, %s32
      %p38 = scmp.ge.s32.totalorder %s37, 8
      %s39 = scalar_select %p38, 0, %s37
      %s40 = sadd.s32 1, %s31
      %s41 = scalar_select %p38, %s40, %s31
      %p42 = scmp.ge.s32.totalorder %s41, 1
      %s43 = scalar_select %p42, 0, %s41
      %s44 = ssub.s32 %s32, %s39
      %s45 = ssub.s32 %s31, %s43
      %s46 = sor.u32 %s44, %s45
      %p47 = scmp.eq.s32.totalorder %s46, 0
      %s49 = sadd.s32 %s48, 1
      %s50 = scalar_select %p47, %s48, %s49
      %p53 = pneg %p47
      %p54 = scmp.eq.s32.totalorder %s24, 7
      %p55 = por %p53, %p54
      %p56 = scmp.ne.s32.totalorder %s48, %s51
      %p57 = scmp.eq.s32.totalorder %s24, 0
      %p58 = por %p56, %p57
      %p59 = scmp.ne.s32.totalorder %s48, %s51
      %p60 = scmp.eq.s32.totalorder %s29, 7
      %p61 = por %p59, %p60
      %p62 = scmp.ne.s32.totalorder %s51, %s52
      %p63 = scmp.eq.s32.totalorder %s29, 0
      %p64 = por %p62, %p63
      %p65 = scmp.ne.s32.totalorder %s51, %s52
      %p66 = scmp.eq.s32.totalorder %s30, 7
      %p67 = por %p65, %p66
      %p69 = scmp.ne.s32.totalorder %s52, %s68
      %p70 = scmp.eq.s32.totalorder %s30, 0
      %p71 = por %p69, %p70
      %s72 = ssub.s32 %s31, %s43
      %p73 = scmp.eq.s32.totalorder %s72, 0
      %s75 = sadd.s32 %s74, 1
      %s76 = scalar_select %p73, %s74, %s75
      %p79 = pneg %p73
      %p80 = scmp.eq.s32.totalorder %s24, 7
      %p81 = por %p79, %p80
      %p82 = scmp.ne.s32.totalorder %s74, %s77
      %p83 = scmp.eq.s32.totalorder %s24, 0
      %p84 = por %p82, %p83
      %p85 = scmp.ne.s32.totalorder %s74, %s77
      %p86 = scmp.eq.s32.totalorder %s29, 7
      %p87 = por %p85, %p86
      %p88 = scmp.ne.s32.totalorder %s77, %s78
      %p89 = scmp.eq.s32.totalorder %s29, 0
      %p90 = por %p88, %p89
      %p91 = scmp.ne.s32.totalorder %s77, %s78
      %p92 = scmp.eq.s32.totalorder %s30, 7
      %p93 = por %p91, %p92
      %p95 = scmp.ne.s32.totalorder %s78, %s94
      %p96 = scmp.eq.s32.totalorder %s30, 0
      %p97 = por %p95, %p96
      %s99 = sadd.s32 %s98, 1
      %p102 = scmp.eq.s32.totalorder %s24, 7
      %p103 = scmp.ne.s32.totalorder %s98, %s100
      %p104 = scmp.eq.s32.totalorder %s24, 0
      %p105 = por %p103, %p104
      %p106 = scmp.ne.s32.totalorder %s98, %s100
      %p107 = scmp.eq.s32.totalorder %s29, 7
      %p108 = por %p106, %p107
      %p109 = scmp.ne.s32.totalorder %s100, %s101
      %p110 = scmp.eq.s32.totalorder %s29, 0
      %p111 = por %p109, %p110
      %p112 = scmp.ne.s32.totalorder %s100, %s101
      %p113 = scmp.eq.s32.totalorder %s30, 7
      %p114 = por %p112, %p113
      %p116 = scmp.ne.s32.totalorder %s101, %s115
      %p117 = scmp.eq.s32.totalorder %s30, 0
      %p118 = por %p116, %p117
      %s120 = sadd.s32 %s119, 1
      %p123 = scmp.eq.s32.totalorder %s24, 7
      %p124 = scmp.ne.s32.totalorder %s119, %s121
      %p125 = scmp.eq.s32.totalorder %s24, 0
      %p126 = por %p124, %p125
      %p127 = scmp.ne.s32.totalorder %s119, %s121
      %p128 = scmp.eq.s32.totalorder %s29, 7
      %p129 = por %p127, %p128
      %p130 = scmp.ne.s32.totalorder %s121, %s122
      %p131 = scmp.eq.s32.totalorder %s29, 0
      %p132 = por %p130, %p131
      %p133 = scmp.ne.s32.totalorder %s121, %s122
      %p134 = scmp.eq.s32.totalorder %s30, 7
      %p135 = por %p133, %p134
      %p137 = scmp.ne.s32.totalorder %s122, %s136
      %p138 = scmp.eq.s32.totalorder %s30, 0
      %p139 = por %p137, %p138
      %s141 = sadd.s32 %s140, 1
      %p144 = scmp.eq.s32.totalorder %s24, 7
      %p145 = scmp.ne.s32.totalorder %s140, %s142
      %p146 = scmp.eq.s32.totalorder %s24, 0
      %p147 = por %p145, %p146
      %p148 = scmp.ne.s32.totalorder %s140, %s142
      %p149 = scmp.eq.s32.totalorder %s29, 7
      %p150 = por %p148, %p149
      %p151 = scmp.ne.s32.totalorder %s142, %s143
      %p152 = scmp.eq.s32.totalorder %s29, 0
      %p153 = por %p151, %p152
      %p154 = scmp.ne.s32.totalorder %s142, %s143
      %p155 = scmp.eq.s32.totalorder %s30, 7
      %p156 = por %p154, %p155
      %p158 = scmp.ne.s32.totalorder %s143, %s157
      %p159 = scmp.eq.s32.totalorder %s30, 0
      %p160 = por %p158, %p159
      %s162 = sadd.s32 %s161, 1
      %p165 = scmp.eq.s32.totalorder %s24, 7
      %p166 = scmp.ne.s32.totalorder %s161, %s163
      %p167 = scmp.eq.s32.totalorder %s24, 0
      %p168 = por %p166, %p167
      %p169 = scmp.ne.s32.totalorder %s161, %s163
      %p170 = scmp.eq.s32.totalorder %s29, 7
      %p171 = por %p169, %p170
      %p172 = scmp.ne.s32.totalorder %s163, %s164
      %p173 = scmp.eq.s32.totalorder %s29, 0
      %p174 = por %p172, %p173
      %p175 = scmp.ne.s32.totalorder %s163, %s164
      %p176 = scmp.eq.s32.totalorder %s30, 7
      %p177 = por %p175, %p176
      %p179 = scmp.ne.s32.totalorder %s164, %s178
      %p180 = scmp.eq.s32.totalorder %s30, 0
      %p181 = por %p179, %p180
      %s183 = sadd.s32 %s182, 1
      %p186 = scmp.eq.s32.totalorder %s24, 7
      %p187 = scmp.ne.s32.totalorder %s182, %s184
      %p188 = scmp.eq.s32.totalorder %s24, 0
      %p189 = por %p187, %p188
      %p190 = scmp.ne.s32.totalorder %s182, %s184
      %p191 = scmp.eq.s32.totalorder %s29, 7
      %p192 = por %p190, %p191
      %p193 = scmp.ne.s32.totalorder %s184, %s185
      %p194 = scmp.eq.s32.totalorder %s29, 0
      %p195 = por %p193, %p194
      %p196 = scmp.ne.s32.totalorder %s184, %s185
      %p197 = scmp.eq.s32.totalorder %s30, 7
      %p198 = por %p196, %p197
      %p200 = scmp.ne.s32.totalorder %s185, %s199
      %p201 = scmp.eq.s32.totalorder %s30, 0
      %p202 = por %p200, %p201
      %s203 = ssub.s32 %s31, %s43
      %p204 = scmp.eq.s32.totalorder %s203, 0
      %s206 = sadd.s32 %s205, 1
      %s207 = scalar_select %p204, %s205, %s206
      %p210 = pneg %p204
      %p211 = scmp.eq.s32.totalorder %s24, 7
      %p212 = por %p210, %p211
      %p213 = scmp.ne.s32.totalorder %s205, %s208
      %p214 = scmp.eq.s32.totalorder %s24, 0
      %p215 = por %p213, %p214
      %p216 = scmp.ne.s32.totalorder %s205, %s208
      %p217 = scmp.eq.s32.totalorder %s29, 7
      %p218 = por %p216, %p217
      %p219 = scmp.ne.s32.totalorder %s208, %s209
      %p220 = scmp.eq.s32.totalorder %s29, 0
      %p221 = por %p219, %p220
      %p222 = scmp.ne.s32.totalorder %s208, %s209
      %p223 = scmp.eq.s32.totalorder %s30, 7
      %p224 = por %p222, %p223
      %p226 = scmp.ne.s32.totalorder %s209, %s225
      %p227 = scmp.eq.s32.totalorder %s30, 0
      %p228 = por %p226, %p227
      %s229 = ssub.s32 %s32, %s39
      %s230 = ssub.s32 %s31, %s43
      %s231 = sor.u32 %s229, %s230
      %p232 = scmp.eq.s32.totalorder %s231, 0
      %s234 = sadd.s32 %s233, 1
      %s235 = scalar_select %p232, %s233, %s234
      %p238 = pneg %p232
      %p239 = scmp.eq.s32.totalorder %s24, 7
      %p240 = por %p238, %p239
      %p241 = scmp.ne.s32.totalorder %s233, %s236
      %p242 = scmp.eq.s32.totalorder %s24, 0
      %p243 = por %p241, %p242
      %p244 = scmp.ne.s32.totalorder %s233, %s236
      %p245 = scmp.eq.s32.totalorder %s29, 7
      %p246 = por %p244, %p245
      %p247 = scmp.ne.s32.totalorder %s236, %s237
      %p248 = scmp.eq.s32.totalorder %s29, 0
      %p249 = por %p247, %p248
      %p250 = scmp.ne.s32.totalorder %s236, %s237
      %p251 = scmp.eq.s32.totalorder %s30, 7
      %p252 = por %p250, %p251
      %p254 = scmp.ne.s32.totalorder %s237, %s253
      %p255 = scmp.eq.s32.totalorder %s30, 0
      %p256 = por %p254, %p255
      %p257 = scmp.le.s32.totalorder 1, %s24
      %p258 = scmp.lt.s32.totalorder %s24, 9
      %p259 = pnand %p257, %p258
      %p260 = pneg %p259
      // Predicated region
      $region9: #{tpu_custom_call.1} parent=5 // pred_check
        _
      $region10: #{tpu_custom_call.1} parent=5 // pred_check_branch
        %262 = sbr.rel (%p259) target = $region12
      $region11: #{tpu_custom_call.1} parent=5 // pred_region
        %s263 = ssub.s32 %s24, 1
        // Predicated region
        $region13: #{tpu_custom_call.1} parent=11 // pred_check
          %p264 = pneg %p90
        $region14: #{tpu_custom_call.1} parent=11 // pred_check_branch
          %266 = sbr.rel (%p264) target = $region16
        $region15: #{tpu_custom_call.1} parent=11 // pred_region
          %s267 = smul.u32 32, %s33
          %s269 = ssub.s32 4096, 4096
          %270 = vsyncadd [#allocation7], %s269
          %s271 = smul.addr %s267, 128
          %s272 = scalar_lea.hbm %s1, %s271
          %s273 = sshll.u32 [#allocation6], 4
          %s274 = int_to_ptr.vmem [resolvable:$true] %s273
          %279 = dma.hbm_to_vmem [thread:$0]  %s272, 4096, %s274, [#allocation7], 128, 128, 8
        $region16: #{tpu_custom_call.1} parent=11 // pred_fallthru
          _
        // Predicated region
        $region17: #{tpu_custom_call.1} parent=11 // pred_check
          %p280 = pneg %p111
        $region18: #{tpu_custom_call.1} parent=11 // pred_check_branch
          %282 = sbr.rel (%p280) target = $region20
        $region19: #{tpu_custom_call.1} parent=11 // pred_region
          %s284 = ssub.s32 1024, 1024
          %285 = vsyncadd [#allocation7], %s284
          %s286 = sshll.u32 [#allocation8], 4
          %s287 = int_to_ptr.vmem [resolvable:$true] %s286
          %292 = dma.hbm_to_vmem [thread:$0]  %s2, 1024, %s287, [#allocation7], 64, 64, 4
        $region20: #{tpu_custom_call.1} parent=11 // pred_fallthru
          _
        // Predicated region
        $region21: #{tpu_custom_call.1} parent=11 // pred_check
          %p293 = pneg %p132
        $region22: #{tpu_custom_call.1} parent=11 // pred_check_branch
          %295 = sbr.rel (%p293) target = $region24
        $region23: #{tpu_custom_call.1} parent=11 // pred_region
          %s297 = ssub.s32 1024, 1024
          %298 = vsyncadd [#allocation10], %s297
          %s299 = sshll.u32 [#allocation9], 4
          %s300 = int_to_ptr.vmem [resolvable:$true] %s299
          %305 = dma.hbm_to_vmem [thread:$0]  %s3, 1024, %s300, [#allocation10], 64, 64, 4
        $region24: #{tpu_custom_call.1} parent=11 // pred_fallthru
          _
        // Predicated region
        $region25: #{tpu_custom_call.1} parent=11 // pred_check
          %p306 = pneg %p153
        $region26: #{tpu_custom_call.1} parent=11 // pred_check_branch
          %308 = sbr.rel (%p306) target = $region28
        $region27: #{tpu_custom_call.1} parent=11 // pred_region
          _
        $region28: #{tpu_custom_call.1} parent=11 // pred_fallthru
          _
        // Predicated region
        $region29: #{tpu_custom_call.1} parent=11 // pred_check
          %p309 = pneg %p174
        $region30: #{tpu_custom_call.1} parent=11 // pred_check_branch
          %311 = sbr.rel (%p309) target = $region32
        $region31: #{tpu_custom_call.1} parent=11 // pred_region
          %s313 = ssub.s32 1024, 1024
          %314 = vsyncadd [#allocation10], %s313
          %s315 = sshll.u32 [#allocation11], 4
          %s316 = int_to_ptr.vmem [resolvable:$true] %s315
          %321 = dma.hbm_to_vmem [thread:$0]  %s5, 1024, %s316, [#allocation10], 64, 64, 4
        $region32: #{tpu_custom_call.1} parent=11 // pred_fallthru
          _
        // Predicated region
        $region33: #{tpu_custom_call.1} parent=11 // pred_check
          %p322 = pneg %p195
        $region34: #{tpu_custom_call.1} parent=11 // pred_check_branch
          %324 = sbr.rel (%p322) target = $region36
        $region35: #{tpu_custom_call.1} parent=11 // pred_region
          _
        $region36: #{tpu_custom_call.1} parent=11 // pred_fallthru
          _
      $region12: #{tpu_custom_call.1} parent=5 // pred_fallthru
        _
      %p325 = scmp.lt.s32.totalorder %s24, 8
      // Predicated region
      $region37: #{tpu_custom_call.1} parent=5 // pred_check
        %p326 = pneg %p325
      $region38: #{tpu_custom_call.1} parent=5 // pred_check_branch
        %328 = sbr.rel (%p326) target = $region40
      $region39: #{tpu_custom_call.1} parent=5 // pred_region
        // Predicated region
        $region41: #{tpu_custom_call.1} parent=39 // pred_check
          %p329 = pneg %p58
        $region42: #{tpu_custom_call.1} parent=39 // pred_check_branch
          %331 = sbr.rel (%p329) target = $region44
        $region43: #{tpu_custom_call.1} parent=39 // pred_region
          %s332 = sand.u32 %s48, 1
          %s333 = scalar_lea.sflag [#allocation4], %s332
          %s334 = sand.u32 %s48, 1
          %s335 = smul.addr %s334, 128
          %s336 = scalar_lea.vmem [#allocation3], %s335
          %s337 = smul.u32 32, %s31
          %s339 = ssub.s32 2048, 2048
          %340 = vsyncadd %s333, %s339
          %s341 = smul.addr %s32, 32
          %s342 = sadd.s32 %s337, %s341
          %s343 = smul.addr %s342, 64
          %s344 = scalar_lea.hbm %s0, %s343
          %s345 = sshll.u32 %s336, 4
          %s346 = int_to_ptr.vmem [resolvable:$true] %s345
          %351 = dma.hbm_to_vmem [thread:$0]  %s344, 2048, %s346, %s333, 64, 64, 4
        $region44: #{tpu_custom_call.1} parent=39 // pred_fallthru
          _
      $region40: #{tpu_custom_call.1} parent=5 // pred_fallthru
        _
      %p352 = scmp.le.s32.totalorder 1, %s24
      %p353 = scmp.lt.s32.totalorder %s24, 9
      %p354 = pnand %p352, %p353
      %p355 = pneg %p354
      // Predicated region
      $region45: #{tpu_custom_call.1} parent=5 // pred_check
        _
      $region46: #{tpu_custom_call.1} parent=5 // pred_check_branch
        %357 = sbr.rel (%p354) target = $region48
      $region47: #{tpu_custom_call.1} parent=5 // pred_region
        %s358 = ssub.s32 %s24, 1
        %s359 = sand.u32 %s51, 1
        %s360 = scalar_lea.sflag [#allocation4], %s359
        %s361 = sand.u32 %s51, 1
        %s362 = smul.addr %s361, 128
        %s363 = scalar_lea.vmem [#allocation3], %s362
        // Predicated region
        $region49: #{tpu_custom_call.1} parent=47 // pred_check
          %p364 = pneg %p64
        $region50: #{tpu_custom_call.1} parent=47 // pred_check_branch
          %366 = sbr.rel (%p364) target = $region52
        $region51: #{tpu_custom_call.1} parent=47 // pred_region
          %367 = dma.done %s360, 2048
        $region52: #{tpu_custom_call.1} parent=47 // pred_fallthru
          _
        // Predicated region
        $region53: #{tpu_custom_call.1} parent=47 // pred_check
          %p368 = pneg %p90
        $region54: #{tpu_custom_call.1} parent=47 // pred_check_branch
          %370 = sbr.rel (%p368) target = $region56
        $region55: #{tpu_custom_call.1} parent=47 // pred_region
          %371 = dma.done [#allocation7], 4096
        $region56: #{tpu_custom_call.1} parent=47 // pred_fallthru
          _
        // Predicated region
        $region57: #{tpu_custom_call.1} parent=47 // pred_check
          %p372 = pneg %p111
        $region58: #{tpu_custom_call.1} parent=47 // pred_check_branch
          %374 = sbr.rel (%p372) target = $region60
        $region59: #{tpu_custom_call.1} parent=47 // pred_region
          %375 = dma.done [#allocation7], 1024
        $region60: #{tpu_custom_call.1} parent=47 // pred_fallthru
          _
        // Predicated region
        $region61: #{tpu_custom_call.1} parent=47 // pred_check
          %p376 = pneg %p132
        $region62: #{tpu_custom_call.1} parent=47 // pred_check_branch
          %378 = sbr.rel (%p376) target = $region64
        $region63: #{tpu_custom_call.1} parent=47 // pred_region
          %379 = dma.done [#allocation10], 1024
        $region64: #{tpu_custom_call.1} parent=47 // pred_fallthru
          _
        // Predicated region
        $region65: #{tpu_custom_call.1} parent=47 // pred_check
          %p380 = pneg %p174
        $region66: #{tpu_custom_call.1} parent=47 // pred_check_branch
          %382 = sbr.rel (%p380) target = $region68
        $region67: #{tpu_custom_call.1} parent=47 // pred_region
          %383 = dma.done [#allocation10], 1024
        $region68: #{tpu_custom_call.1} parent=47 // pred_fallthru
          _
        %s384 = sand.u32 %s51, 1
        %s385 = scalar_lea.sflag [#allocation4], %s384
        %s386 = sand.u32 %s51, 1
        %s387 = smul.addr %s386, 128
        %s388 = scalar_lea.vmem [#allocation3], %s387
        %p389 = pneg %p64
        %p390 = pneg %p61
        %p391 = pneg %p90
        %p392 = pneg %p87
        %p393 = pneg %p111
        %p394 = pneg %p108
        %p395 = pneg %p132
        %p396 = pneg %p129
        %p397 = pneg %p153
        %p398 = pneg %p150
        %p399 = pneg %p174
        %p400 = pneg %p171
        %p401 = pneg %p195
        %p402 = pneg %p192
        %p403 = pneg %p221
        %p404 = pneg %p218
        %p405 = pneg %p249
        %p406 = pneg %p246
        %s407 = sand.u32 %s236, 1
        %s408 = scalar_lea.sflag [#allocation14], %s407
        %s409 = sand.u32 %s236, 1
        %s410 = smul.addr %s409, 256
        %s411 = scalar_lea.vmem [#allocation13], %s410
        %s412 = smul.u32 32, %s33
        %s413 = smul.u32 32, %s33
        %s414 = smul.u32 32, %s33
        %s415 = smul.u32 32, %s33
        %p417 = scmp.eq.s32.totalorder %s34, 0
        // Predicated region
        $region69: #{tpu_custom_call.1} parent=47 // pred_check
          %p418 = pneg %p417
        $region70: #{tpu_custom_call.1} parent=47 // pred_check_branch
          %420 = sbr.rel (%p418) target = $region72
        $region71: #{tpu_custom_call.1} parent=47 // pred_region
          %v421 = vld [vmem:[#allocation6] sm:$0xff]
          %v422 = vld [vmem:[#allocation6 + $0x8] sm:$0xff]
          %v423 = vld [vmem:[#allocation6 + $0x10] sm:$0xff]
          %v424 = vld [vmem:[#allocation6 + $0x18] sm:$0xff]
          %v425 = vld [vmem:[#allocation6 + $0x20] sm:$0xff]
          %v426 = vld [vmem:[#allocation6 + $0x28] sm:$0xff]
          %v427 = vld [vmem:[#allocation6 + $0x30] sm:$0xff]
          %v428 = vld [vmem:[#allocation6 + $0x38] sm:$0xff]
          %v429 = vld [vmem:[#allocation6 + $0x40] sm:$0xff]
          %v430 = vld [vmem:[#allocation6 + $0x48] sm:$0xff]
          %v431 = vld [vmem:[#allocation6 + $0x50] sm:$0xff]
          %v432 = vld [vmem:[#allocation6 + $0x58] sm:$0xff]
          %v433 = vld [vmem:[#allocation6 + $0x60] sm:$0xff]
          %v434 = vld [vmem:[#allocation6 + $0x68] sm:$0xff]
          %v435 = vld [vmem:[#allocation6 + $0x70] sm:$0xff]
          %v436 = vld [vmem:[#allocation6 + $0x78] sm:$0xff]
          %v437 = vld [vmem:[#allocation6 + $0x80] sm:$0xff]
          %v438 = vld [vmem:[#allocation6 + $0x88] sm:$0xff]
          %v439 = vld [vmem:[#allocation6 + $0x90] sm:$0xff]
          %v440 = vld [vmem:[#allocation6 + $0x98] sm:$0xff]
          %v441 = vld [vmem:[#allocation6 + $0xa0] sm:$0xff]
          %v442 = vld [vmem:[#allocation6 + $0xa8] sm:$0xff]
          %v443 = vld [vmem:[#allocation6 + $0xb0] sm:$0xff]
          %v444 = vld [vmem:[#allocation6 + $0xb8] sm:$0xff]
          %v445 = vld [vmem:[#allocation6 + $0xc0] sm:$0xff]
          %v446 = vld [vmem:[#allocation6 + $0xc8] sm:$0xff]
          %v447 = vld [vmem:[#allocation6 + $0xd0] sm:$0xff]
          %v448 = vld [vmem:[#allocation6 + $0xd8] sm:$0xff]
          %v449 = vld [vmem:[#allocation6 + $0xe0] sm:$0xff]
          %v450 = vld [vmem:[#allocation6 + $0xe8] sm:$0xff]
          %v451 = vld [vmem:[#allocation6 + $0xf0] sm:$0xff]
          %v452 = vld [vmem:[#allocation6 + $0xf8] sm:$0xff]
          %453 = vst [vmem:[#allocation2] sm:$0xff] %v421
          %454 = vst [vmem:[#allocation2 + $0x8] sm:$0xff] %v422
          %455 = vst [vmem:[#allocation2 + $0x10] sm:$0xff] %v423
          %456 = vst [vmem:[#allocation2 + $0x18] sm:$0xff] %v424
          %457 = vst [vmem:[#allocation2 + $0x20] sm:$0xff] %v425
          %458 = vst [vmem:[#allocation2 + $0x28] sm:$0xff] %v426
          %459 = vst [vmem:[#allocation2 + $0x30] sm:$0xff] %v427
          %460 = vst [vmem:[#allocation2 + $0x38] sm:$0xff] %v428
          %461 = vst [vmem:[#allocation2 + $0x40] sm:$0xff] %v429
          %462 = vst [vmem:[#allocation2 + $0x48] sm:$0xff] %v430
          %463 = vst [vmem:[#allocation2 + $0x50] sm:$0xff] %v431
          %464 = vst [vmem:[#allocation2 + $0x58] sm:$0xff] %v432
          %465 = vst [vmem:[#allocation2 + $0x60] sm:$0xff] %v433
          %466 = vst [vmem:[#allocation2 + $0x68] sm:$0xff] %v434
          %467 = vst [vmem:[#allocation2 + $0x70] sm:$0xff] %v435
          %468 = vst [vmem:[#allocation2 + $0x78] sm:$0xff] %v436
          %469 = vst [vmem:[#allocation2 + $0x80] sm:$0xff] %v437
          %470 = vst [vmem:[#allocation2 + $0x88] sm:$0xff] %v438
          %471 = vst [vmem:[#allocation2 + $0x90] sm:$0xff] %v439
          %472 = vst [vmem:[#allocation2 + $0x98] sm:$0xff] %v440
          %473 = vst [vmem:[#allocation2 + $0xa0] sm:$0xff] %v441
          %474 = vst [vmem:[#allocation2 + $0xa8] sm:$0xff] %v442
          %475 = vst [vmem:[#allocation2 + $0xb0] sm:$0xff] %v443
          %476 = vst [vmem:[#allocation2 + $0xb8] sm:$0xff] %v444
          %477 = vst [vmem:[#allocation2 + $0xc0] sm:$0xff] %v445
          %478 = vst [vmem:[#allocation2 + $0xc8] sm:$0xff] %v446
          %479 = vst [vmem:[#allocation2 + $0xd0] sm:$0xff] %v447
          %480 = vst [vmem:[#allocation2 + $0xd8] sm:$0xff] %v448
          %481 = vst [vmem:[#allocation2 + $0xe0] sm:$0xff] %v449
          %482 = vst [vmem:[#allocation2 + $0xe8] sm:$0xff] %v450
          %483 = vst [vmem:[#allocation2 + $0xf0] sm:$0xff] %v451
          %484 = vst [vmem:[#allocation2 + $0xf8] sm:$0xff] %v452
        $region72: #{tpu_custom_call.1} parent=47 // pred_fallthru
          _
        %v485 = vld [vmem:[%s363] sm:$0xf]
        %v486 = vld [vmem:[%s363 + $0x4] sm:$0xf]
        %v487 = vld [vmem:[%s363 + $0x8] sm:$0xf]
        %v488 = vld [vmem:[%s363 + $0xc] sm:$0xf]
        %v489 = vld [vmem:[%s363 + $0x10] sm:$0xf]
        %v490 = vld [vmem:[%s363 + $0x14] sm:$0xf]
        %v491 = vld [vmem:[%s363 + $0x18] sm:$0xf]
        %v492 = vld [vmem:[%s363 + $0x1c] sm:$0xf]
        %v493 = vld [vmem:[%s363 + $0x20] sm:$0xf]
        %v494 = vld [vmem:[%s363 + $0x24] sm:$0xf]
        %v495 = vld [vmem:[%s363 + $0x28] sm:$0xf]
        %v496 = vld [vmem:[%s363 + $0x2c] sm:$0xf]
        %v497 = vld [vmem:[%s363 + $0x30] sm:$0xf]
        %v498 = vld [vmem:[%s363 + $0x34] sm:$0xf]
        %v499 = vld [vmem:[%s363 + $0x38] sm:$0xf]
        %v500 = vld [vmem:[%s363 + $0x3c] sm:$0xf]
        %v501 = vld [vmem:[%s363 + $0x40] sm:$0xf]
        %v502 = vld [vmem:[%s363 + $0x44] sm:$0xf]
        %v503 = vld [vmem:[%s363 + $0x48] sm:$0xf]
        %v504 = vld [vmem:[%s363 + $0x4c] sm:$0xf]
        %v505 = vld [vmem:[%s363 + $0x50] sm:$0xf]
        %v506 = vld [vmem:[%s363 + $0x54] sm:$0xf]
        %v507 = vld [vmem:[%s363 + $0x58] sm:$0xf]
        %v508 = vld [vmem:[%s363 + $0x5c] sm:$0xf]
        %v509 = vld [vmem:[%s363 + $0x60] sm:$0xf]
        %v510 = vld [vmem:[%s363 + $0x64] sm:$0xf]
        %v511 = vld [vmem:[%s363 + $0x68] sm:$0xf]
        %v512 = vld [vmem:[%s363 + $0x6c] sm:$0xf]
        %v513 = vld [vmem:[%s363 + $0x70] sm:$0xf]
        %v514 = vld [vmem:[%s363 + $0x74] sm:$0xf]
        %v515 = vld [vmem:[%s363 + $0x78] sm:$0xf]
        %v516 = vld [vmem:[%s363 + $0x7c] sm:$0xf]
        %v517 = vld [vmem:[#allocation2] sm:$0xff]
        %v518 = vld [vmem:[#allocation2 + $0x8] sm:$0xff]
        %v519 = vld [vmem:[#allocation2 + $0x10] sm:$0xff]
        %v520 = vld [vmem:[#allocation2 + $0x18] sm:$0xff]
        %v521 = vld [vmem:[#allocation2 + $0x20] sm:$0xff]
        %v522 = vld [vmem:[#allocation2 + $0x28] sm:$0xff]
        %v523 = vld [vmem:[#allocation2 + $0x30] sm:$0xff]
        %v524 = vld [vmem:[#allocation2 + $0x38] sm:$0xff]
        %v525 = vld [vmem:[#allocation2 + $0x40] sm:$0xff]
        %v526 = vld [vmem:[#allocation2 + $0x48] sm:$0xff]
        %v527 = vld [vmem:[#allocation2 + $0x50] sm:$0xff]
        %v528 = vld [vmem:[#allocation2 + $0x58] sm:$0xff]
        %v529 = vld [vmem:[#allocation2 + $0x60] sm:$0xff]
        %v530 = vld [vmem:[#allocation2 + $0x68] sm:$0xff]
        %v531 = vld [vmem:[#allocation2 + $0x70] sm:$0xff]
        %v532 = vld [vmem:[#allocation2 + $0x78] sm:$0xff]
        %v533 = vld [vmem:[#allocation2 + $0x80] sm:$0xff]
        %v534 = vld [vmem:[#allocation2 + $0x88] sm:$0xff]
        %v535 = vld [vmem:[#allocation2 + $0x90] sm:$0xff]
        %v536 = vld [vmem:[#allocation2 + $0x98] sm:$0xff]
        %v537 = vld [vmem:[#allocation2 + $0xa0] sm:$0xff]
        %v538 = vld [vmem:[#allocation2 + $0xa8] sm:$0xff]
        %v539 = vld [vmem:[#allocation2 + $0xb0] sm:$0xff]
        %v540 = vld [vmem:[#allocation2 + $0xb8] sm:$0xff]
        %v541 = vld [vmem:[#allocation2 + $0xc0] sm:$0xff]
        %v542 = vld [vmem:[#allocation2 + $0xc8] sm:$0xff]
        %v543 = vld [vmem:[#allocation2 + $0xd0] sm:$0xff]
        %v544 = vld [vmem:[#allocation2 + $0xd8] sm:$0xff]
        %v545 = vld [vmem:[#allocation2 + $0xe0] sm:$0xff]
        %v546 = vld [vmem:[#allocation2 + $0xe8] sm:$0xff]
        %v547 = vld [vmem:[#allocation2 + $0xf0] sm:$0xff]
        %v548 = vld [vmem:[#allocation2 + $0xf8] sm:$0xff]
        %v549 = vpack.c.bf16 %v518, %v517
        %v550 = vpack.c.bf16 %v520, %v519
        %v551 = vpack.c.bf16 %v522, %v521
        %v552 = vpack.c.bf16 %v524, %v523
        %v553 = vpack.c.bf16 %v526, %v525
        %v554 = vpack.c.bf16 %v528, %v527
        %v555 = vpack.c.bf16 %v530, %v529
        %v556 = vpack.c.bf16 %v532, %v531
        %v557 = vpack.c.bf16 %v534, %v533
        %v558 = vpack.c.bf16 %v536, %v535
        %v559 = vpack.c.bf16 %v538, %v537
        %v560 = vpack.c.bf16 %v540, %v539
        %v561 = vpack.c.bf16 %v542, %v541
        %v562 = vpack.c.bf16 %v544, %v543
        %v563 = vpack.c.bf16 %v546, %v545
        %v564 = vpack.c.bf16 %v548, %v547
        %v565 = vld [vmem:[#allocation8] sm:$0xf]
        %v566 = vld [vmem:[#allocation8 + $0x4] sm:$0xf]
        %v567 = vld [vmem:[#allocation8 + $0x8] sm:$0xf]
        %v568 = vld [vmem:[#allocation8 + $0xc] sm:$0xf]
        %v569 = vld [vmem:[#allocation8 + $0x10] sm:$0xf]
        %v570 = vld [vmem:[#allocation8 + $0x14] sm:$0xf]
        %v571 = vld [vmem:[#allocation8 + $0x18] sm:$0xf]
        %v572 = vld [vmem:[#allocation8 + $0x1c] sm:$0xf]
        %v573 = vld [vmem:[#allocation8 + $0x20] sm:$0xf]
        %v574 = vld [vmem:[#allocation8 + $0x24] sm:$0xf]
        %v575 = vld [vmem:[#allocation8 + $0x28] sm:$0xf]
        %v576 = vld [vmem:[#allocation8 + $0x2c] sm:$0xf]
        %v577 = vld [vmem:[#allocation8 + $0x30] sm:$0xf]
        %v578 = vld [vmem:[#allocation8 + $0x34] sm:$0xf]
        %v579 = vld [vmem:[#allocation8 + $0x38] sm:$0xf]
        %v580 = vld [vmem:[#allocation8 + $0x3c] sm:$0xf]
        %v581 = vld [vmem:[#allocation9] sm:$0xf]
        %v582 = vld [vmem:[#allocation9 + $0x4] sm:$0xf]
        %v583 = vld [vmem:[#allocation9 + $0x8] sm:$0xf]
        %v584 = vld [vmem:[#allocation9 + $0xc] sm:$0xf]
        %v585 = vld [vmem:[#allocation9 + $0x10] sm:$0xf]
        %v586 = vld [vmem:[#allocation9 + $0x14] sm:$0xf]
        %v587 = vld [vmem:[#allocation9 + $0x18] sm:$0xf]
        %v588 = vld [vmem:[#allocation9 + $0x1c] sm:$0xf]
        %v589 = vld [vmem:[#allocation9 + $0x20] sm:$0xf]
        %v590 = vld [vmem:[#allocation9 + $0x24] sm:$0xf]
        %v591 = vld [vmem:[#allocation9 + $0x28] sm:$0xf]
        %v592 = vld [vmem:[#allocation9 + $0x2c] sm:$0xf]
        %v593 = vld [vmem:[#allocation9 + $0x30] sm:$0xf]
        %v594 = vld [vmem:[#allocation9 + $0x34] sm:$0xf]
        %v595 = vld [vmem:[#allocation9 + $0x38] sm:$0xf]
        %v596 = vld [vmem:[#allocation9 + $0x3c] sm:$0xf]
        %v613 = vunpack.c.l.b16 %v581
        %v614 = vunpack.c.l.b16 %v582
        %v615 = vunpack.c.l.b16 %v583
        %v616 = vunpack.c.l.b16 %v584
        %v617 = vunpack.c.l.b16 %v585
        %v618 = vunpack.c.l.b16 %v586
        %v619 = vunpack.c.l.b16 %v587
        %v620 = vunpack.c.l.b16 %v588
        %v621 = vunpack.c.l.b16 %v589
        %v622 = vunpack.c.l.b16 %v590
        %v623 = vunpack.c.l.b16 %v591
        %v624 = vunpack.c.l.b16 %v592
        %v625 = vunpack.c.l.b16 %v593
        %v626 = vunpack.c.l.b16 %v594
        %v627 = vunpack.c.l.b16 %v595
        %v628 = vunpack.c.l.b16 %v596
        %v629 = vpack.c.b16 %v614, %v613
        %v630 = vpack.c.b16 %v616, %v615
        %v631 = vpack.c.b16 %v618, %v617
        %v632 = vpack.c.b16 %v620, %v619
        %v633 = vpack.c.b16 %v622, %v621
        %v634 = vpack.c.b16 %v624, %v623
        %v635 = vpack.c.b16 %v626, %v625
        %v636 = vpack.c.b16 %v628, %v627
        %645 = vmatprep.subr.bf16.mxu0 0
        %646 = vmatpush1.bf16.msra.mxu0 %v629
        %647 = vmatprep.subr.bf16.mxu0 0
        %648 = vmatpush1.bf16.msra.mxu0 %v630
        %649 = vmatprep.subr.bf16.mxu0 0
        %650 = vmatpush1.bf16.msra.mxu0 %v631
        %651 = vmatprep.subr.bf16.mxu0 0
        %652 = vmatpush1.bf16.msra.mxu0 %v632
        %653 = vmatprep.subr.bf16.mxu0 0
        %654 = vmatpush1.bf16.msra.mxu0 %v633
        %655 = vmatprep.subr.bf16.mxu0 0
        %656 = vmatpush1.bf16.msra.mxu0 %v634
        %657 = vmatprep.subr.bf16.mxu0 0
        %658 = vmatpush1.bf16.msra.mxu0 %v635
        %659 = vmatprep.subr.bf16.mxu0 0
        %660 = vmatpush1.bf16.msra.mxu0 %v636
        %661 = vmatprep.subr.bf16.mxu0 0
        %662 = vmatpush1.bf16.msra.mxu0 0
        %663 = vmatprep.subr.bf16.mxu0 0
        %664 = vmatpush1.bf16.msra.mxu0 0
        %665 = vmatprep.subr.bf16.mxu0 0
        %666 = vmatpush1.bf16.msra.mxu0 0
        %667 = vmatprep.subr.bf16.mxu0 0
        %668 = vmatpush1.bf16.msra.mxu0 0
        %669 = vmatprep.subr.bf16.mxu0 0
        %670 = vmatpush1.bf16.msra.mxu0 0
        %671 = vmatprep.subr.bf16.mxu0 0
        %672 = vmatpush1.bf16.msra.mxu0 0
        %673 = vmatprep.subr.bf16.mxu0 0
        %674 = vmatpush1.bf16.msra.mxu0 0
        %675 = vmatprep.subr.bf16.mxu0 0
        %676 = vmatpush1.bf16.msra.mxu0 0
        %677 = vmatprep.mubr.bf16.mxu0 0
        %678 = vmatmul.mubr.bf16.gmra.mrb[0].mxu0 %v549
        %v679 = vpop.f32.mrb[0].mxu0
        %v680 = vadd.f32 0.0, %v679
        %v681 = vpop.f32.mrb[0].mxu0
        %v682 = vpop.f32.mrb[0].mxu0
        %v683 = vadd.f32 0.0, %v682
        %v684 = vpop.f32.mrb[0].mxu0
        %685 = vmatprep.mubr.bf16.mxu0 0
        %686 = vmatmul.mubr.bf16.gmra.mrb[0].mxu0 %v550
        %v687 = vpop.f32.mrb[0].mxu0
        %v688 = vadd.f32 0.0, %v687
        %v689 = vpop.f32.mrb[0].mxu0
        %v690 = vpop.f32.mrb[0].mxu0
        %v691 = vadd.f32 0.0, %v690
        %v692 = vpop.f32.mrb[0].mxu0
        %693 = vmatprep.mubr.bf16.mxu0 0
        %694 = vmatmul.mubr.bf16.gmra.mrb[0].mxu0 %v551
        %v695 = vpop.f32.mrb[0].mxu0
        %v696 = vadd.f32 0.0, %v695
        %v697 = vpop.f32.mrb[0].mxu0
        %v698 = vpop.f32.mrb[0].mxu0
        %v699 = vadd.f32 0.0, %v698
        %v700 = vpop.f32.mrb[0].mxu0
        %701 = vmatprep.mubr.bf16.mxu0 0
        %702 = vmatmul.mubr.bf16.gmra.mrb[0].mxu0 %v552
        %v703 = vpop.f32.mrb[0].mxu0
        %v704 = vadd.f32 0.0, %v703
        %v705 = vpop.f32.mrb[0].mxu0
        %v706 = vpop.f32.mrb[0].mxu0
        %v707 = vadd.f32 0.0, %v706
        %v708 = vpop.f32.mrb[0].mxu0
        %709 = vmatprep.mubr.bf16.mxu0 0
        %710 = vmatmul.mubr.bf16.gmra.mrb[0].mxu0 %v553
        %v711 = vpop.f32.mrb[0].mxu0
        %v712 = vadd.f32 0.0, %v711
        %v713 = vpop.f32.mrb[0].mxu0
        %v714 = vpop.f32.mrb[0].mxu0
        %v715 = vadd.f32 0.0, %v714
        %v716 = vpop.f32.mrb[0].mxu0
        %717 = vmatprep.mubr.bf16.mxu0 0
        %718 = vmatmul.mubr.bf16.gmra.mrb[0].mxu0 %v554
        %v719 = vpop.f32.mrb[0].mxu0
        %v720 = vadd.f32 0.0, %v719
        %v721 = vpop.f32.mrb[0].mxu0
        %v722 = vpop.f32.mrb[0].mxu0
        %v723 = vadd.f32 0.0, %v722
        %v724 = vpop.f32.mrb[0].mxu0
        %725 = vmatprep.mubr.bf16.mxu0 0
        %726 = vmatmul.mubr.bf16.gmra.mrb[0].mxu0 %v555
        %v727 = vpop.f32.mrb[0].mxu0
        %v728 = vadd.f32 0.0, %v727
        %v729 = vpop.f32.mrb[0].mxu0
        %v730 = vpop.f32.mrb[0].mxu0
        %v731 = vadd.f32 0.0, %v730
        %v732 = vpop.f32.mrb[0].mxu0
        %733 = vmatprep.mubr.bf16.mxu0 0
        %734 = vmatmul.mubr.bf16.gmra.mrb[0].mxu0 %v556
        %v735 = vpop.f32.mrb[0].mxu0
        %v736 = vadd.f32 0.0, %v735
        %v737 = vpop.f32.mrb[0].mxu0
        %v738 = vpop.f32.mrb[0].mxu0
        %v739 = vadd.f32 0.0, %v738
        %v740 = vpop.f32.mrb[0].mxu0
        %741 = vmatprep.mubr.bf16.mxu0 0
        %742 = vmatmul.mubr.bf16.gmra.mrb[0].mxu0 %v557
        %v743 = vpop.f32.mrb[0].mxu0
        %v744 = vadd.f32 0.0, %v743
        %v745 = vpop.f32.mrb[0].mxu0
        %v746 = vpop.f32.mrb[0].mxu0
        %v747 = vadd.f32 0.0, %v746
        %v748 = vpop.f32.mrb[0].mxu0
        %749 = vmatprep.mubr.bf16.mxu0 0
        %750 = vmatmul.mubr.bf16.gmra.mrb[0].mxu0 %v558
        %v751 = vpop.f32.mrb[0].mxu0
        %v752 = vadd.f32 0.0, %v751
        %v753 = vpop.f32.mrb[0].mxu0
        %v754 = vpop.f32.mrb[0].mxu0
        %v755 = vadd.f32 0.0, %v754
        %v756 = vpop.f32.mrb[0].mxu0
        %757 = vmatprep.mubr.bf16.mxu0 0
        %758 = vmatmul.mubr.bf16.gmra.mrb[0].mxu0 %v559
        %v759 = vpop.f32.mrb[0].mxu0
        %v760 = vadd.f32 0.0, %v759
        %v761 = vpop.f32.mrb[0].mxu0
        %v762 = vpop.f32.mrb[0].mxu0
        %v763 = vadd.f32 0.0, %v762
        %v764 = vpop.f32.mrb[0].mxu0
        %765 = vmatprep.mubr.bf16.mxu0 0
        %766 = vmatmul.mubr.bf16.gmra.mrb[0].mxu0 %v560
        %v767 = vpop.f32.mrb[0].mxu0
        %v768 = vadd.f32 0.0, %v767
        %v769 = vpop.f32.mrb[0].mxu0
        %v770 = vpop.f32.mrb[0].mxu0
        %v771 = vadd.f32 0.0, %v770
        %v772 = vpop.f32.mrb[0].mxu0
        %773 = vmatprep.mubr.bf16.mxu0 0
        %774 = vmatmul.mubr.bf16.gmra.mrb[0].mxu0 %v561
        %v775 = vpop.f32.mrb[0].mxu0
        %v776 = vadd.f32 0.0, %v775
        %v777 = vpop.f32.mrb[0].mxu0
        %v778 = vpop.f32.mrb[0].mxu0
        %v779 = vadd.f32 0.0, %v778
        %v780 = vpop.f32.mrb[0].mxu0
        %781 = vmatprep.mubr.bf16.mxu0 0
        %782 = vmatmul.mubr.bf16.gmra.mrb[0].mxu0 %v562
        %v783 = vpop.f32.mrb[0].mxu0
        %v784 = vadd.f32 0.0, %v783
        %v785 = vpop.f32.mrb[0].mxu0
        %v786 = vpop.f32.mrb[0].mxu0
        %v787 = vadd.f32 0.0, %v786
        %v788 = vpop.f32.mrb[0].mxu0
        %789 = vmatprep.mubr.bf16.mxu0 0
        %790 = vmatmul.mubr.bf16.gmra.mrb[0].mxu0 %v563
        %v791 = vpop.f32.mrb[0].mxu0
        %v792 = vadd.f32 0.0, %v791
        %v793 = vpop.f32.mrb[0].mxu0
        %v794 = vpop.f32.mrb[0].mxu0
        %v795 = vadd.f32 0.0, %v794
        %v796 = vpop.f32.mrb[0].mxu0
        %797 = vmatprep.mubr.bf16.mxu0 0
        %798 = vmatmul.mubr.bf16.gmra.mrb[0].mxu0 %v564
        %v799 = vpop.f32.mrb[0].mxu0
        %v800 = vadd.f32 0.0, %v799
        %v801 = vpop.f32.mrb[0].mxu0
        %v802 = vpop.f32.mrb[0].mxu0
        %v803 = vadd.f32 0.0, %v802
        %v804 = vpop.f32.mrb[0].mxu0
        %805 = vdwg.mxu0
        %v838 = vunpack.c.l.b16 %v485
        %v839 = vunpack.c.l.b16 %v486
        %v840 = vunpack.c.l.b16 %v487
        %v841 = vunpack.c.l.b16 %v488
        %v842 = vunpack.c.l.b16 %v489
        %v843 = vunpack.c.l.b16 %v490
        %v844 = vunpack.c.l.b16 %v491
        %v845 = vunpack.c.l.b16 %v492
        %v846 = vunpack.c.l.b16 %v493
        %v847 = vunpack.c.l.b16 %v494
        %v848 = vunpack.c.l.b16 %v495
        %v849 = vunpack.c.l.b16 %v496
        %v850 = vunpack.c.l.b16 %v497
        %v851 = vunpack.c.l.b16 %v498
        %v852 = vunpack.c.l.b16 %v499
        %v853 = vunpack.c.l.b16 %v500
        %v854 = vunpack.c.l.b16 %v501
        %v855 = vunpack.c.l.b16 %v502
        %v856 = vunpack.c.l.b16 %v503
        %v857 = vunpack.c.l.b16 %v504
        %v858 = vunpack.c.l.b16 %v505
        %v859 = vunpack.c.l.b16 %v506
        %v860 = vunpack.c.l.b16 %v507
        %v861 = vunpack.c.l.b16 %v508
        %v862 = vunpack.c.l.b16 %v509
        %v863 = vunpack.c.l.b16 %v510
        %v864 = vunpack.c.l.b16 %v511
        %v865 = vunpack.c.l.b16 %v512
        %v866 = vunpack.c.l.b16 %v513
        %v867 = vunpack.c.l.b16 %v514
        %v868 = vunpack.c.l.b16 %v515
        %v869 = vunpack.c.l.b16 %v516
        %v870 = vpack.c.b16 %v839, %v838
        %v871 = vpack.c.b16 %v841, %v840
        %v872 = vpack.c.b16 %v843, %v842
        %v873 = vpack.c.b16 %v845, %v844
        %v874 = vpack.c.b16 %v847, %v846
        %v875 = vpack.c.b16 %v849, %v848
        %v876 = vpack.c.b16 %v851, %v850
        %v877 = vpack.c.b16 %v853, %v852
        %v878 = vpack.c.b16 %v855, %v854
        %v879 = vpack.c.b16 %v857, %v856
        %v880 = vpack.c.b16 %v859, %v858
        %v881 = vpack.c.b16 %v861, %v860
        %v882 = vpack.c.b16 %v863, %v862
        %v883 = vpack.c.b16 %v865, %v864
        %v884 = vpack.c.b16 %v867, %v866
        %v885 = vpack.c.b16 %v869, %v868
        %v918 = vunpack.c.l.b16 %v565
        %v919 = vunpack.c.l.b16 %v566
        %v920 = vunpack.c.l.b16 %v567
        %v921 = vunpack.c.l.b16 %v568
        %v922 = vunpack.c.l.b16 %v569
        %v923 = vunpack.c.l.b16 %v570
        %v924 = vunpack.c.l.b16 %v571
        %v925 = vunpack.c.l.b16 %v572
        %v926 = vunpack.c.l.b16 %v573
        %v927 = vunpack.c.l.b16 %v574
        %v928 = vunpack.c.l.b16 %v575
        %v929 = vunpack.c.l.b16 %v576
        %v930 = vunpack.c.l.b16 %v577
        %v931 = vunpack.c.l.b16 %v578
        %v932 = vunpack.c.l.b16 %v579
        %v933 = vunpack.c.l.b16 %v580
        %v934 = vpack.c.b16 %v919, %v918
        %v935 = vpack.c.b16 %v921, %v920
        %v936 = vpack.c.b16 %v923, %v922
        %v937 = vpack.c.b16 %v925, %v924
        %v938 = vpack.c.b16 %v927, %v926
        %v939 = vpack.c.b16 %v929, %v928
        %v940 = vpack.c.b16 %v931, %v930
        %v941 = vpack.c.b16 %v933, %v932
        %950 = vmatprep.subr.bf16.mxu0 0
        %951 = vmatpush1.bf16.msra.mxu0 %v934
        %952 = vmatprep.subr.bf16.mxu0 0
        %953 = vmatpush1.bf16.msra.mxu0 %v935
        %954 = vmatprep.subr.bf16.mxu0 0
        %955 = vmatpush1.bf16.msra.mxu0 %v936
        %956 = vmatprep.subr.bf16.mxu0 0
        %957 = vmatpush1.bf16.msra.mxu0 %v937
        %958 = vmatprep.subr.bf16.mxu0 0
        %959 = vmatpush1.bf16.msra.mxu0 %v938
        %960 = vmatprep.subr.bf16.mxu0 0
        %961 = vmatpush1.bf16.msra.mxu0 %v939
        %962 = vmatprep.subr.bf16.mxu0 0
        %963 = vmatpush1.bf16.msra.mxu0 %v940
        %964 = vmatprep.subr.bf16.mxu0 0
        %965 = vmatpush1.bf16.msra.mxu0 %v941
        %966 = vmatprep.subr.bf16.mxu0 0
        %967 = vmatpush1.bf16.msra.mxu0 0
        %968 = vmatprep.subr.bf16.mxu0 0
        %969 = vmatpush1.bf16.msra.mxu0 0
        %970 = vmatprep.subr.bf16.mxu0 0
        %971 = vmatpush1.bf16.msra.mxu0 0
        %972 = vmatprep.subr.bf16.mxu0 0
        %973 = vmatpush1.bf16.msra.mxu0 0
        %974 = vmatprep.subr.bf16.mxu0 0
        %975 = vmatpush1.bf16.msra.mxu0 0
        %976 = vmatprep.subr.bf16.mxu0 0
        %977 = vmatpush1.bf16.msra.mxu0 0
        %978 = vmatprep.subr.bf16.mxu0 0
        %979 = vmatpush1.bf16.msra.mxu0 0
        %980 = vmatprep.subr.bf16.mxu0 0
        %981 = vmatpush1.bf16.msra.mxu0 0
        %982 = vmatprep.mubr.bf16.mxu0 0
        %983 = vmatmul.mubr.bf16.gmra.mrb[0].mxu0 %v870
        %v984 = vpop.f32.mrb[0].mxu0
        %v985 = vadd.f32 %v680, %v984
        %v986 = vpop.f32.mrb[0].mxu0
        %v987 = vpop.f32.mrb[0].mxu0
        %v988 = vadd.f32 %v683, %v987
        %v989 = vpop.f32.mrb[0].mxu0
        %990 = vmatprep.mubr.bf16.mxu0 0
        %991 = vmatmul.mubr.bf16.gmra.mrb[0].mxu0 %v871
        %v992 = vpop.f32.mrb[0].mxu0
        %v993 = vadd.f32 %v688, %v992
        %v994 = vpop.f32.mrb[0].mxu0
        %v995 = vpop.f32.mrb[0].mxu0
        %v996 = vadd.f32 %v691, %v995
        %v997 = vpop.f32.mrb[0].mxu0
        %998 = vmatprep.mubr.bf16.mxu0 0
        %999 = vmatmul.mubr.bf16.gmra.mrb[0].mxu0 %v872
        %v1000 = vpop.f32.mrb[0].mxu0
        %v1001 = vadd.f32 %v696, %v1000
        %v1002 = vpop.f32.mrb[0].mxu0
        %v1003 = vpop.f32.mrb[0].mxu0
        %v1004 = vadd.f32 %v699, %v1003
        %v1005 = vpop.f32.mrb[0].mxu0
        %1006 = vmatprep.mubr.bf16.mxu0 0
        %1007 = vmatmul.mubr.bf16.gmra.mrb[0].mxu0 %v873
        %v1008 = vpop.f32.mrb[0].mxu0
        %v1009 = vadd.f32 %v704, %v1008
        %v1010 = vpop.f32.mrb[0].mxu0
        %v1011 = vpop.f32.mrb[0].mxu0
        %v1012 = vadd.f32 %v707, %v1011
        %v1013 = vpop.f32.mrb[0].mxu0
        %1014 = vmatprep.mubr.bf16.mxu0 0
        %1015 = vmatmul.mubr.bf16.gmra.mrb[0].mxu0 %v874
        %v1016 = vpop.f32.mrb[0].mxu0
        %v1017 = vadd.f32 %v712, %v1016
        %v1018 = vpop.f32.mrb[0].mxu0
        %v1019 = vpop.f32.mrb[0].mxu0
        %v1020 = vadd.f32 %v715, %v1019
        %v1021 = vpop.f32.mrb[0].mxu0
        %1022 = vmatprep.mubr.bf16.mxu0 0
        %1023 = vmatmul.mubr.bf16.gmra.mrb[0].mxu0 %v875
        %v1024 = vpop.f32.mrb[0].mxu0
        %v1025 = vadd.f32 %v720, %v1024
        %v1026 = vpop.f32.mrb[0].mxu0
        %v1027 = vpop.f32.mrb[0].mxu0
        %v1028 = vadd.f32 %v723, %v1027
        %v1029 = vpop.f32.mrb[0].mxu0
        %1030 = vmatprep.mubr.bf16.mxu0 0
        %1031 = vmatmul.mubr.bf16.gmra.mrb[0].mxu0 %v876
        %v1032 = vpop.f32.mrb[0].mxu0
        %v1033 = vadd.f32 %v728, %v1032
        %v1034 = vpop.f32.mrb[0].mxu0
        %v1035 = vpop.f32.mrb[0].mxu0
        %v1036 = vadd.f32 %v731, %v1035
        %v1037 = vpop.f32.mrb[0].mxu0
        %1038 = vmatprep.mubr.bf16.mxu0 0
        %1039 = vmatmul.mubr.bf16.gmra.mrb[0].mxu0 %v877
        %v1040 = vpop.f32.mrb[0].mxu0
        %v1041 = vadd.f32 %v736, %v1040
        %v1042 = vpop.f32.mrb[0].mxu0
        %v1043 = vpop.f32.mrb[0].mxu0
        %v1044 = vadd.f32 %v739, %v1043
        %v1045 = vpop.f32.mrb[0].mxu0
        %1046 = vmatprep.mubr.bf16.mxu0 0
        %1047 = vmatmul.mubr.bf16.gmra.mrb[0].mxu0 %v878
        %v1048 = vpop.f32.mrb[0].mxu0
        %v1049 = vadd.f32 %v744, %v1048
        %v1050 = vpop.f32.mrb[0].mxu0
        %v1051 = vpop.f32.mrb[0].mxu0
        %v1052 = vadd.f32 %v747, %v1051
        %v1053 = vpop.f32.mrb[0].mxu0
        %1054 = vmatprep.mubr.bf16.mxu0 0
        %1055 = vmatmul.mubr.bf16.gmra.mrb[0].mxu0 %v879
        %v1056 = vpop.f32.mrb[0].mxu0
        %v1057 = vadd.f32 %v752, %v1056
        %v1058 = vpop.f32.mrb[0].mxu0
        %v1059 = vpop.f32.mrb[0].mxu0
        %v1060 = vadd.f32 %v755, %v1059
        %v1061 = vpop.f32.mrb[0].mxu0
        %1062 = vmatprep.mubr.bf16.mxu0 0
        %1063 = vmatmul.mubr.bf16.gmra.mrb[0].mxu0 %v880
        %v1064 = vpop.f32.mrb[0].mxu0
        %v1065 = vadd.f32 %v760, %v1064
        %v1066 = vpop.f32.mrb[0].mxu0
        %v1067 = vpop.f32.mrb[0].mxu0
        %v1068 = vadd.f32 %v763, %v1067
        %v1069 = vpop.f32.mrb[0].mxu0
        %1070 = vmatprep.mubr.bf16.mxu0 0
        %1071 = vmatmul.mubr.bf16.gmra.mrb[0].mxu0 %v881
        %v1072 = vpop.f32.mrb[0].mxu0
        %v1073 = vadd.f32 %v768, %v1072
        %v1074 = vpop.f32.mrb[0].mxu0
        %v1075 = vpop.f32.mrb[0].mxu0
        %v1076 = vadd.f32 %v771, %v1075
        %v1077 = vpop.f32.mrb[0].mxu0
        %1078 = vmatprep.mubr.bf16.mxu0 0
        %1079 = vmatmul.mubr.bf16.gmra.mrb[0].mxu0 %v882
        %v1080 = vpop.f32.mrb[0].mxu0
        %v1081 = vadd.f32 %v776, %v1080
        %v1082 = vpop.f32.mrb[0].mxu0
        %v1083 = vpop.f32.mrb[0].mxu0
        %v1084 = vadd.f32 %v779, %v1083
        %v1085 = vpop.f32.mrb[0].mxu0
        %1086 = vmatprep.mubr.bf16.mxu0 0
        %1087 = vmatmul.mubr.bf16.gmra.mrb[0].mxu0 %v883
        %v1088 = vpop.f32.mrb[0].mxu0
        %v1089 = vadd.f32 %v784, %v1088
        %v1090 = vpop.f32.mrb[0].mxu0
        %v1091 = vpop.f32.mrb[0].mxu0
        %v1092 = vadd.f32 %v787, %v1091
        %v1093 = vpop.f32.mrb[0].mxu0
        %1094 = vmatprep.mubr.bf16.mxu0 0
        %1095 = vmatmul.mubr.bf16.gmra.mrb[0].mxu0 %v884
        %v1096 = vpop.f32.mrb[0].mxu0
        %v1097 = vadd.f32 %v792, %v1096
        %v1098 = vpop.f32.mrb[0].mxu0
        %v1099 = vpop.f32.mrb[0].mxu0
        %v1100 = vadd.f32 %v795, %v1099
        %v1101 = vpop.f32.mrb[0].mxu0
        %1102 = vmatprep.mubr.bf16.mxu0 0
        %1103 = vmatmul.mubr.bf16.gmra.mrb[0].mxu0 %v885
        %v1104 = vpop.f32.mrb[0].mxu0
        %v1105 = vadd.f32 %v800, %v1104
        %v1106 = vpop.f32.mrb[0].mxu0
        %v1107 = vpop.f32.mrb[0].mxu0
        %v1108 = vadd.f32 %v803, %v1107
        %v1109 = vpop.f32.mrb[0].mxu0
        %1110 = vdwg.mxu0
        %v1111 = vld [vmem:[%s4] sm:$0x1]
        %v1113 = vlaneseq
        %v1114 = vshrl.u32 %v1113, 7
        %v1115 = vsub.s32 0, %v1114
        %v1116 = vrot.slane %v1111, %v1115
        %v1118 = vadd.f32 %v985, %v1116
        %v1119 = vadd.f32 %v988, %v1116
        %v1120 = vadd.f32 %v993, %v1116
        %v1121 = vadd.f32 %v996, %v1116
        %v1122 = vadd.f32 %v1001, %v1116
        %v1123 = vadd.f32 %v1004, %v1116
        %v1124 = vadd.f32 %v1009, %v1116
        %v1125 = vadd.f32 %v1012, %v1116
        %v1126 = vadd.f32 %v1017, %v1116
        %v1127 = vadd.f32 %v1020, %v1116
        %v1128 = vadd.f32 %v1025, %v1116
        %v1129 = vadd.f32 %v1028, %v1116
        %v1130 = vadd.f32 %v1033, %v1116
        %v1131 = vadd.f32 %v1036, %v1116
        %v1132 = vadd.f32 %v1041, %v1116
        %v1133 = vadd.f32 %v1044, %v1116
        %v1134 = vadd.f32 %v1049, %v1116
        %v1135 = vadd.f32 %v1052, %v1116
        %v1136 = vadd.f32 %v1057, %v1116
        %v1137 = vadd.f32 %v1060, %v1116
        %v1138 = vadd.f32 %v1065, %v1116
        %v1139 = vadd.f32 %v1068, %v1116
        %v1140 = vadd.f32 %v1073, %v1116
        %v1141 = vadd.f32 %v1076, %v1116
        %v1142 = vadd.f32 %v1081, %v1116
        %v1143 = vadd.f32 %v1084, %v1116
        %v1144 = vadd.f32 %v1089, %v1116
        %v1145 = vadd.f32 %v1092, %v1116
        %v1146 = vadd.f32 %v1097, %v1116
        %v1147 = vadd.f32 %v1100, %v1116
        %v1148 = vadd.f32 %v1105, %v1116
        %v1149 = vadd.f32 %v1108, %v1116
        %v1150 = vtanh.pop %v1118
        %v1151 = vtanh.pop %v1119
        %v1152 = vtanh.pop %v1120
        %v1153 = vtanh.pop %v1121
        %v1154 = vtanh.pop %v1122
        %v1155 = vtanh.pop %v1123
        %v1156 = vtanh.pop %v1124
        %v1157 = vtanh.pop %v1125
        %v1158 = vtanh.pop %v1126
        %v1159 = vtanh.pop %v1127
        %v1160 = vtanh.pop %v1128
        %v1161 = vtanh.pop %v1129
        %v1162 = vtanh.pop %v1130
        %v1163 = vtanh.pop %v1131
        %v1164 = vtanh.pop %v1132
        %v1165 = vtanh.pop %v1133
        %v1166 = vtanh.pop %v1134
        %v1167 = vtanh.pop %v1135
        %v1168 = vtanh.pop %v1136
        %v1169 = vtanh.pop %v1137
        %v1170 = vtanh.pop %v1138
        %v1171 = vtanh.pop %v1139
        %v1172 = vtanh.pop %v1140
        %v1173 = vtanh.pop %v1141
        %v1174 = vtanh.pop %v1142
        %v1175 = vtanh.pop %v1143
        %v1176 = vtanh.pop %v1144
        %v1177 = vtanh.pop %v1145
        %v1178 = vtanh.pop %v1146
        %v1179 = vtanh.pop %v1147
        %v1180 = vtanh.pop %v1148
        %v1181 = vtanh.pop %v1149
        %1182 = vst [vmem:[#allocation2] sm:$0xff] %v1150
        %1183 = vst [vmem:[#allocation2 + $0x8] sm:$0xff] %v1151
        %1184 = vst [vmem:[#allocation2 + $0x10] sm:$0xff] %v1152
        %1185 = vst [vmem:[#allocation2 + $0x18] sm:$0xff] %v1153
        %1186 = vst [vmem:[#allocation2 + $0x20] sm:$0xff] %v1154
        %1187 = vst [vmem:[#allocation2 + $0x28] sm:$0xff] %v1155
        %1188 = vst [vmem:[#allocation2 + $0x30] sm:$0xff] %v1156
        %1189 = vst [vmem:[#allocation2 + $0x38] sm:$0xff] %v1157
        %1190 = vst [vmem:[#allocation2 + $0x40] sm:$0xff] %v1158
        %1191 = vst [vmem:[#allocation2 + $0x48] sm:$0xff] %v1159
        %1192 = vst [vmem:[#allocation2 + $0x50] sm:$0xff] %v1160
        %1193 = vst [vmem:[#allocation2 + $0x58] sm:$0xff] %v1161
        %1194 = vst [vmem:[#allocation2 + $0x60] sm:$0xff] %v1162
        %1195 = vst [vmem:[#allocation2 + $0x68] sm:$0xff] %v1163
        %1196 = vst [vmem:[#allocation2 + $0x70] sm:$0xff] %v1164
        %1197 = vst [vmem:[#allocation2 + $0x78] sm:$0xff] %v1165
        %1198 = vst [vmem:[#allocation2 + $0x80] sm:$0xff] %v1166
        %1199 = vst [vmem:[#allocation2 + $0x88] sm:$0xff] %v1167
        %1200 = vst [vmem:[#allocation2 + $0x90] sm:$0xff] %v1168
        %1201 = vst [vmem:[#allocation2 + $0x98] sm:$0xff] %v1169
        %1202 = vst [vmem:[#allocation2 + $0xa0] sm:$0xff] %v1170
        %1203 = vst [vmem:[#allocation2 + $0xa8] sm:$0xff] %v1171
        %1204 = vst [vmem:[#allocation2 + $0xb0] sm:$0xff] %v1172
        %1205 = vst [vmem:[#allocation2 + $0xb8] sm:$0xff] %v1173
        %1206 = vst [vmem:[#allocation2 + $0xc0] sm:$0xff] %v1174
        %1207 = vst [vmem:[#allocation2 + $0xc8] sm:$0xff] %v1175
        %1208 = vst [vmem:[#allocation2 + $0xd0] sm:$0xff] %v1176
        %1209 = vst [vmem:[#allocation2 + $0xd8] sm:$0xff] %v1177
        %1210 = vst [vmem:[#allocation2 + $0xe0] sm:$0xff] %v1178
        %1211 = vst [vmem:[#allocation2 + $0xe8] sm:$0xff] %v1179
        %1212 = vst [vmem:[#allocation2 + $0xf0] sm:$0xff] %v1180
        %1213 = vst [vmem:[#allocation2 + $0xf8] sm:$0xff] %v1181
        %v1214 = vpack.c.bf16 %v1151, %v1150
        %v1215 = vpack.c.bf16 %v1153, %v1152
        %v1216 = vpack.c.bf16 %v1155, %v1154
        %v1217 = vpack.c.bf16 %v1157, %v1156
        %v1218 = vpack.c.bf16 %v1159, %v1158
        %v1219 = vpack.c.bf16 %v1161, %v1160
        %v1220 = vpack.c.bf16 %v1163, %v1162
        %v1221 = vpack.c.bf16 %v1165, %v1164
        %v1222 = vpack.c.bf16 %v1167, %v1166
        %v1223 = vpack.c.bf16 %v1169, %v1168
        %v1224 = vpack.c.bf16 %v1171, %v1170
        %v1225 = vpack.c.bf16 %v1173, %v1172
        %v1226 = vpack.c.bf16 %v1175, %v1174
        %v1227 = vpack.c.bf16 %v1177, %v1176
        %v1228 = vpack.c.bf16 %v1179, %v1178
        %v1229 = vpack.c.bf16 %v1181, %v1180
        %v1230 = vld [vmem:[#allocation11] sm:$0xf]
        %v1231 = vld [vmem:[#allocation11 + $0x4] sm:$0xf]
        %v1232 = vld [vmem:[#allocation11 + $0x8] sm:$0xf]
        %v1233 = vld [vmem:[#allocation11 + $0xc] sm:$0xf]
        %v1234 = vld [vmem:[#allocation11 + $0x10] sm:$0xf]
        %v1235 = vld [vmem:[#allocation11 + $0x14] sm:$0xf]
        %v1236 = vld [vmem:[#allocation11 + $0x18] sm:$0xf]
        %v1237 = vld [vmem:[#allocation11 + $0x1c] sm:$0xf]
        %v1238 = vld [vmem:[#allocation11 + $0x20] sm:$0xf]
        %v1239 = vld [vmem:[#allocation11 + $0x24] sm:$0xf]
        %v1240 = vld [vmem:[#allocation11 + $0x28] sm:$0xf]
        %v1241 = vld [vmem:[#allocation11 + $0x2c] sm:$0xf]
        %v1242 = vld [vmem:[#allocation11 + $0x30] sm:$0xf]
        %v1243 = vld [vmem:[#allocation11 + $0x34] sm:$0xf]
        %v1244 = vld [vmem:[#allocation11 + $0x38] sm:$0xf]
        %v1245 = vld [vmem:[#allocation11 + $0x3c] sm:$0xf]
        %v1246 = vld [vmem:[%s6] sm:$0x1]
        %v1248 = vlaneseq
        %v1249 = vshrl.u32 %v1248, 7
        %v1250 = vsub.s32 0, %v1249
        %v1251 = vrot.slane %v1246, %v1250
        %v1269 = vunpack.c.l.b16 %v1230
        %v1270 = vunpack.c.l.b16 %v1231
        %v1271 = vunpack.c.l.b16 %v1232
        %v1272 = vunpack.c.l.b16 %v1233
        %v1273 = vunpack.c.l.b16 %v1234
        %v1274 = vunpack.c.l.b16 %v1235
        %v1275 = vunpack.c.l.b16 %v1236
        %v1276 = vunpack.c.l.b16 %v1237
        %v1277 = vunpack.c.l.b16 %v1238
        %v1278 = vunpack.c.l.b16 %v1239
        %v1279 = vunpack.c.l.b16 %v1240
        %v1280 = vunpack.c.l.b16 %v1241
        %v1281 = vunpack.c.l.b16 %v1242
        %v1282 = vunpack.c.l.b16 %v1243
        %v1283 = vunpack.c.l.b16 %v1244
        %v1284 = vunpack.c.l.b16 %v1245
        %v1285 = vpack.c.b16 %v1270, %v1269
        %v1286 = vpack.c.b16 %v1272, %v1271
        %v1287 = vpack.c.b16 %v1274, %v1273
        %v1288 = vpack.c.b16 %v1276, %v1275
        %v1289 = vpack.c.b16 %v1278, %v1277
        %v1290 = vpack.c.b16 %v1280, %v1279
        %v1291 = vpack.c.b16 %v1282, %v1281
        %v1292 = vpack.c.b16 %v1284, %v1283
        %1301 = vmatprep.subr.bf16.mxu0 0
        %1302 = vmatpush1.bf16.msra.mxu0 %v1285
        %1303 = vmatprep.subr.bf16.mxu0 0
        %1304 = vmatpush1.bf16.msra.mxu0 %v1286
        %1305 = vmatprep.subr.bf16.mxu0 0
        %1306 = vmatpush1.bf16.msra.mxu0 %v1287
        %1307 = vmatprep.subr.bf16.mxu0 0
        %1308 = vmatpush1.bf16.msra.mxu0 %v1288
        %1309 = vmatprep.subr.bf16.mxu0 0
        %1310 = vmatpush1.bf16.msra.mxu0 %v1289
        %1311 = vmatprep.subr.bf16.mxu0 0
        %1312 = vmatpush1.bf16.msra.mxu0 %v1290
        %1313 = vmatprep.subr.bf16.mxu0 0
        %1314 = vmatpush1.bf16.msra.mxu0 %v1291
        %1315 = vmatprep.subr.bf16.mxu0 0
        %1316 = vmatpush1.bf16.msra.mxu0 %v1292
        %1317 = vmatprep.subr.bf16.mxu0 0
        %1318 = vmatpush1.bf16.msra.mxu0 0
        %1319 = vmatprep.subr.bf16.mxu0 0
        %1320 = vmatpush1.bf16.msra.mxu0 0
        %1321 = vmatprep.subr.bf16.mxu0 0
        %1322 = vmatpush1.bf16.msra.mxu0 0
        %1323 = vmatprep.subr.bf16.mxu0 0
        %1324 = vmatpush1.bf16.msra.mxu0 0
        %1325 = vmatprep.subr.bf16.mxu0 0
        %1326 = vmatpush1.bf16.msra.mxu0 0
        %1327 = vmatprep.subr.bf16.mxu0 0
        %1328 = vmatpush1.bf16.msra.mxu0 0
        %1329 = vmatprep.subr.bf16.mxu0 0
        %1330 = vmatpush1.bf16.msra.mxu0 0
        %1331 = vmatprep.subr.bf16.mxu0 0
        %1332 = vmatpush1.bf16.msra.mxu0 0
        %1333 = vmatprep.mubr.bf16.mxu0 0
        %1334 = vmatmul.mubr.bf16.gmra.mrb[0].mxu0 %v1214
        %v1335 = vpop.f32.mrb[0].mxu0
        %v1336 = vadd.f32 %v1251, %v1335
        %v1337 = vpop.f32.mrb[0].mxu0
        %v1338 = vpop.f32.mrb[0].mxu0
        %v1339 = vadd.f32 %v1251, %v1338
        %v1340 = vpop.f32.mrb[0].mxu0
        %1341 = vmatprep.mubr.bf16.mxu0 0
        %1342 = vmatmul.mubr.bf16.gmra.mrb[0].mxu0 %v1215
        %v1343 = vpop.f32.mrb[0].mxu0
        %v1344 = vadd.f32 %v1251, %v1343
        %v1345 = vpop.f32.mrb[0].mxu0
        %v1346 = vpop.f32.mrb[0].mxu0
        %v1347 = vadd.f32 %v1251, %v1346
        %v1348 = vpop.f32.mrb[0].mxu0
        %1349 = vmatprep.mubr.bf16.mxu0 0
        %1350 = vmatmul.mubr.bf16.gmra.mrb[0].mxu0 %v1216
        %v1351 = vpop.f32.mrb[0].mxu0
        %v1352 = vadd.f32 %v1251, %v1351
        %v1353 = vpop.f32.mrb[0].mxu0
        %v1354 = vpop.f32.mrb[0].mxu0
        %v1355 = vadd.f32 %v1251, %v1354
        %v1356 = vpop.f32.mrb[0].mxu0
        %1357 = vmatprep.mubr.bf16.mxu0 0
        %1358 = vmatmul.mubr.bf16.gmra.mrb[0].mxu0 %v1217
        %v1359 = vpop.f32.mrb[0].mxu0
        %v1360 = vadd.f32 %v1251, %v1359
        %v1361 = vpop.f32.mrb[0].mxu0
        %v1362 = vpop.f32.mrb[0].mxu0
        %v1363 = vadd.f32 %v1251, %v1362
        %v1364 = vpop.f32.mrb[0].mxu0
        %1365 = vmatprep.mubr.bf16.mxu0 0
        %1366 = vmatmul.mubr.bf16.gmra.mrb[0].mxu0 %v1218
        %v1367 = vpop.f32.mrb[0].mxu0
        %v1368 = vadd.f32 %v1251, %v1367
        %v1369 = vpop.f32.mrb[0].mxu0
        %v1370 = vpop.f32.mrb[0].mxu0
        %v1371 = vadd.f32 %v1251, %v1370
        %v1372 = vpop.f32.mrb[0].mxu0
        %1373 = vmatprep.mubr.bf16.mxu0 0
        %1374 = vmatmul.mubr.bf16.gmra.mrb[0].mxu0 %v1219
        %v1375 = vpop.f32.mrb[0].mxu0
        %v1376 = vadd.f32 %v1251, %v1375
        %v1377 = vpop.f32.mrb[0].mxu0
        %v1378 = vpop.f32.mrb[0].mxu0
        %v1379 = vadd.f32 %v1251, %v1378
        %v1380 = vpop.f32.mrb[0].mxu0
        %1381 = vmatprep.mubr.bf16.mxu0 0
        %1382 = vmatmul.mubr.bf16.gmra.mrb[0].mxu0 %v1220
        %v1383 = vpop.f32.mrb[0].mxu0
        %v1384 = vadd.f32 %v1251, %v1383
        %v1385 = vpop.f32.mrb[0].mxu0
        %v1386 = vpop.f32.mrb[0].mxu0
        %v1387 = vadd.f32 %v1251, %v1386
        %v1388 = vpop.f32.mrb[0].mxu0
        %1389 = vmatprep.mubr.bf16.mxu0 0
        %1390 = vmatmul.mubr.bf16.gmra.mrb[0].mxu0 %v1221
        %v1391 = vpop.f32.mrb[0].mxu0
        %v1392 = vadd.f32 %v1251, %v1391
        %v1393 = vpop.f32.mrb[0].mxu0
        %v1394 = vpop.f32.mrb[0].mxu0
        %v1395 = vadd.f32 %v1251, %v1394
        %v1396 = vpop.f32.mrb[0].mxu0
        %1397 = vmatprep.mubr.bf16.mxu0 0
        %1398 = vmatmul.mubr.bf16.gmra.mrb[0].mxu0 %v1222
        %v1399 = vpop.f32.mrb[0].mxu0
        %v1400 = vadd.f32 %v1251, %v1399
        %v1401 = vpop.f32.mrb[0].mxu0
        %v1402 = vpop.f32.mrb[0].mxu0
        %v1403 = vadd.f32 %v1251, %v1402
        %v1404 = vpop.f32.mrb[0].mxu0
        %1405 = vmatprep.mubr.bf16.mxu0 0
        %1406 = vmatmul.mubr.bf16.gmra.mrb[0].mxu0 %v1223
        %v1407 = vpop.f32.mrb[0].mxu0
        %v1408 = vadd.f32 %v1251, %v1407
        %v1409 = vpop.f32.mrb[0].mxu0
        %v1410 = vpop.f32.mrb[0].mxu0
        %v1411 = vadd.f32 %v1251, %v1410
        %v1412 = vpop.f32.mrb[0].mxu0
        %1413 = vmatprep.mubr.bf16.mxu0 0
        %1414 = vmatmul.mubr.bf16.gmra.mrb[0].mxu0 %v1224
        %v1415 = vpop.f32.mrb[0].mxu0
        %v1416 = vadd.f32 %v1251, %v1415
        %v1417 = vpop.f32.mrb[0].mxu0
        %v1418 = vpop.f32.mrb[0].mxu0
        %v1419 = vadd.f32 %v1251, %v1418
        %v1420 = vpop.f32.mrb[0].mxu0
        %1421 = vmatprep.mubr.bf16.mxu0 0
        %1422 = vmatmul.mubr.bf16.gmra.mrb[0].mxu0 %v1225
        %v1423 = vpop.f32.mrb[0].mxu0
        %v1424 = vadd.f32 %v1251, %v1423
        %v1425 = vpop.f32.mrb[0].mxu0
        %v1426 = vpop.f32.mrb[0].mxu0
        %v1427 = vadd.f32 %v1251, %v1426
        %v1428 = vpop.f32.mrb[0].mxu0
        %1429 = vmatprep.mubr.bf16.mxu0 0
        %1430 = vmatmul.mubr.bf16.gmra.mrb[0].mxu0 %v1226
        %v1431 = vpop.f32.mrb[0].mxu0
        %v1432 = vadd.f32 %v1251, %v1431
        %v1433 = vpop.f32.mrb[0].mxu0
        %v1434 = vpop.f32.mrb[0].mxu0
        %v1435 = vadd.f32 %v1251, %v1434
        %v1436 = vpop.f32.mrb[0].mxu0
        %1437 = vmatprep.mubr.bf16.mxu0 0
        %1438 = vmatmul.mubr.bf16.gmra.mrb[0].mxu0 %v1227
        %v1439 = vpop.f32.mrb[0].mxu0
        %v1440 = vadd.f32 %v1251, %v1439
        %v1441 = vpop.f32.mrb[0].mxu0
        %v1442 = vpop.f32.mrb[0].mxu0
        %v1443 = vadd.f32 %v1251, %v1442
        %v1444 = vpop.f32.mrb[0].mxu0
        %1445 = vmatprep.mubr.bf16.mxu0 0
        %1446 = vmatmul.mubr.bf16.gmra.mrb[0].mxu0 %v1228
        %v1447 = vpop.f32.mrb[0].mxu0
        %v1448 = vadd.f32 %v1251, %v1447
        %v1449 = vpop.f32.mrb[0].mxu0
        %v1450 = vpop.f32.mrb[0].mxu0
        %v1451 = vadd.f32 %v1251, %v1450
        %v1452 = vpop.f32.mrb[0].mxu0
        %1453 = vmatprep.mubr.bf16.mxu0 0
        %1454 = vmatmul.mubr.bf16.gmra.mrb[0].mxu0 %v1229
        %v1455 = vpop.f32.mrb[0].mxu0
        %v1456 = vadd.f32 %v1251, %v1455
        %v1457 = vpop.f32.mrb[0].mxu0
        %v1458 = vpop.f32.mrb[0].mxu0
        %v1459 = vadd.f32 %v1251, %v1458
        %v1460 = vpop.f32.mrb[0].mxu0
        %1461 = vdwg.mxu0
        %1462 = vst [vmem:[%s411] sm:$0xff] %v1336
        %1463 = vst [vmem:[%s411 + $0x8] sm:$0xff] %v1339
        %1464 = vst [vmem:[%s411 + $0x10] sm:$0xff] %v1344
        %1465 = vst [vmem:[%s411 + $0x18] sm:$0xff] %v1347
        %1466 = vst [vmem:[%s411 + $0x20] sm:$0xff] %v1352
        %1467 = vst [vmem:[%s411 + $0x28] sm:$0xff] %v1355
        %1468 = vst [vmem:[%s411 + $0x30] sm:$0xff] %v1360
        %1469 = vst [vmem:[%s411 + $0x38] sm:$0xff] %v1363
        %1470 = vst [vmem:[%s411 + $0x40] sm:$0xff] %v1368
        %1471 = vst [vmem:[%s411 + $0x48] sm:$0xff] %v1371
        %1472 = vst [vmem:[%s411 + $0x50] sm:$0xff] %v1376
        %1473 = vst [vmem:[%s411 + $0x58] sm:$0xff] %v1379
        %1474 = vst [vmem:[%s411 + $0x60] sm:$0xff] %v1384
        %1475 = vst [vmem:[%s411 + $0x68] sm:$0xff] %v1387
        %1476 = vst [vmem:[%s411 + $0x70] sm:$0xff] %v1392
        %1477 = vst [vmem:[%s411 + $0x78] sm:$0xff] %v1395
        %1478 = vst [vmem:[%s411 + $0x80] sm:$0xff] %v1400
        %1479 = vst [vmem:[%s411 + $0x88] sm:$0xff] %v1403
        %1480 = vst [vmem:[%s411 + $0x90] sm:$0xff] %v1408
        %1481 = vst [vmem:[%s411 + $0x98] sm:$0xff] %v1411
        %1482 = vst [vmem:[%s411 + $0xa0] sm:$0xff] %v1416
        %1483 = vst [vmem:[%s411 + $0xa8] sm:$0xff] %v1419
        %1484 = vst [vmem:[%s411 + $0xb0] sm:$0xff] %v1424
        %1485 = vst [vmem:[%s411 + $0xb8] sm:$0xff] %v1427
        %1486 = vst [vmem:[%s411 + $0xc0] sm:$0xff] %v1432
        %1487 = vst [vmem:[%s411 + $0xc8] sm:$0xff] %v1435
        %1488 = vst [vmem:[%s411 + $0xd0] sm:$0xff] %v1440
        %1489 = vst [vmem:[%s411 + $0xd8] sm:$0xff] %v1443
        %1490 = vst [vmem:[%s411 + $0xe0] sm:$0xff] %v1448
        %1491 = vst [vmem:[%s411 + $0xe8] sm:$0xff] %v1451
        %1492 = vst [vmem:[%s411 + $0xf0] sm:$0xff] %v1456
        %1493 = vst [vmem:[%s411 + $0xf8] sm:$0xff] %v1459
        %p1494 = scmp.eq.s32.totalorder %s34, 7
        // Predicated region
        $region73: #{tpu_custom_call.1} parent=47 // pred_check
          %p1495 = pneg %p1494
        $region74: #{tpu_custom_call.1} parent=47 // pred_check_branch
          %1497 = sbr.rel (%p1495) target = $region76
        $region75: #{tpu_custom_call.1} parent=47 // pred_region
          %1498 = vst [vmem:[#allocation12] sm:$0xff] %v1150
          %1499 = vst [vmem:[#allocation12 + $0x8] sm:$0xff] %v1151
          %1500 = vst [vmem:[#allocation12 + $0x10] sm:$0xff] %v1152
          %1501 = vst [vmem:[#allocation12 + $0x18] sm:$0xff] %v1153
          %1502 = vst [vmem:[#allocation12 + $0x20] sm:$0xff] %v1154
          %1503 = vst [vmem:[#allocation12 + $0x28] sm:$0xff] %v1155
          %1504 = vst [vmem:[#allocation12 + $0x30] sm:$0xff] %v1156
          %1505 = vst [vmem:[#allocation12 + $0x38] sm:$0xff] %v1157
          %1506 = vst [vmem:[#allocation12 + $0x40] sm:$0xff] %v1158
          %1507 = vst [vmem:[#allocation12 + $0x48] sm:$0xff] %v1159
          %1508 = vst [vmem:[#allocation12 + $0x50] sm:$0xff] %v1160
          %1509 = vst [vmem:[#allocation12 + $0x58] sm:$0xff] %v1161
          %1510 = vst [vmem:[#allocation12 + $0x60] sm:$0xff] %v1162
          %1511 = vst [vmem:[#allocation12 + $0x68] sm:$0xff] %v1163
          %1512 = vst [vmem:[#allocation12 + $0x70] sm:$0xff] %v1164
          %1513 = vst [vmem:[#allocation12 + $0x78] sm:$0xff] %v1165
          %1514 = vst [vmem:[#allocation12 + $0x80] sm:$0xff] %v1166
          %1515 = vst [vmem:[#allocation12 + $0x88] sm:$0xff] %v1167
          %1516 = vst [vmem:[#allocation12 + $0x90] sm:$0xff] %v1168
          %1517 = vst [vmem:[#allocation12 + $0x98] sm:$0xff] %v1169
          %1518 = vst [vmem:[#allocation12 + $0xa0] sm:$0xff] %v1170
          %1519 = vst [vmem:[#allocation12 + $0xa8] sm:$0xff] %v1171
          %1520 = vst [vmem:[#allocation12 + $0xb0] sm:$0xff] %v1172
          %1521 = vst [vmem:[#allocation12 + $0xb8] sm:$0xff] %v1173
          %1522 = vst [vmem:[#allocation12 + $0xc0] sm:$0xff] %v1174
          %1523 = vst [vmem:[#allocation12 + $0xc8] sm:$0xff] %v1175
          %1524 = vst [vmem:[#allocation12 + $0xd0] sm:$0xff] %v1176
          %1525 = vst [vmem:[#allocation12 + $0xd8] sm:$0xff] %v1177
          %1526 = vst [vmem:[#allocation12 + $0xe0] sm:$0xff] %v1178
          %1527 = vst [vmem:[#allocation12 + $0xe8] sm:$0xff] %v1179
          %1528 = vst [vmem:[#allocation12 + $0xf0] sm:$0xff] %v1180
          %1529 = vst [vmem:[#allocation12 + $0xf8] sm:$0xff] %v1181
        $region76: #{tpu_custom_call.1} parent=47 // pred_fallthru
          _
        %s1530 = sand.u32 %s236, 1
        %s1531 = scalar_lea.sflag [#allocation14], %s1530
        %s1532 = sand.u32 %s236, 1
        %s1533 = smul.addr %s1532, 256
        %s1534 = scalar_lea.vmem [#allocation13], %s1533
        // Predicated region
        $region77: #{tpu_custom_call.1} parent=47 // pred_check
          %p1535 = pneg %p218
        $region78: #{tpu_custom_call.1} parent=47 // pred_check_branch
          %1537 = sbr.rel (%p1535) target = $region80
        $region79: #{tpu_custom_call.1} parent=47 // pred_region
          %s1538 = smul.u32 32, %s33
          %s1540 = ssub.s32 4096, 4096
          %1541 = vsyncadd [#allocation5], %s1540
          %s1542 = smul.addr %s1538, 128
          %s1543 = scalar_lea.hbm %s7, %s1542
          %s1544 = sshll.u32 [#allocation12], 4
          %s1545 = int_to_ptr.vmem [resolvable:$true] %s1544
          %1550 = dma.vmem_to_hbm [thread:$0]  %s1545, 4096, %s1543, [#allocation5], 128, 128, 8
        $region80: #{tpu_custom_call.1} parent=47 // pred_fallthru
          _
        // Predicated region
        $region81: #{tpu_custom_call.1} parent=47 // pred_check
          %p1551 = pneg %p246
        $region82: #{tpu_custom_call.1} parent=47 // pred_check_branch
          %1553 = sbr.rel (%p1551) target = $region84
        $region83: #{tpu_custom_call.1} parent=47 // pred_region
          %s1554 = smul.u32 32, %s33
          %s1556 = ssub.s32 4096, 4096
          %1557 = vsyncadd %s1531, %s1556
          %s1558 = smul.addr %s34, 32
          %s1559 = sadd.s32 %s1554, %s1558
          %s1560 = smul.addr %s1559, 128
          %s1561 = scalar_lea.hbm %s8, %s1560
          %s1562 = sshll.u32 %s1534, 4
          %s1563 = int_to_ptr.vmem [resolvable:$true] %s1562
          %1568 = dma.vmem_to_hbm [thread:$0]  %s1563, 4096, %s1561, %s1531, 128, 128, 8
        $region84: #{tpu_custom_call.1} parent=47 // pred_fallthru
          _
        // Predicated region
        $region85: #{tpu_custom_call.1} parent=47 // pred_check
          %p1569 = pneg %p218
        $region86: #{tpu_custom_call.1} parent=47 // pred_check_branch
          %1571 = sbr.rel (%p1569) target = $region88
        $region87: #{tpu_custom_call.1} parent=47 // pred_region
          %1572 = dma.done [#allocation5], 4096
        $region88: #{tpu_custom_call.1} parent=47 // pred_fallthru
          _
      $region48: #{tpu_custom_call.1} parent=5 // pred_fallthru
        _
      %p1573 = scmp.le.s32.totalorder 2, %s24
      // Predicated region
      $region89: #{tpu_custom_call.1} parent=5 // pred_check
        %p1574 = pneg %p1573
      $region90: #{tpu_custom_call.1} parent=5 // pred_check_branch
        %1576 = sbr.rel (%p1574) target = $region92
      $region91: #{tpu_custom_call.1} parent=5 // pred_region
        %s1577 = ssub.s32 %s24, 2
        // Predicated region
        $region93: #{tpu_custom_call.1} parent=91 // pred_check
          %p1578 = pneg %p252
        $region94: #{tpu_custom_call.1} parent=91 // pred_check_branch
          %1580 = sbr.rel (%p1578) target = $region96
        $region95: #{tpu_custom_call.1} parent=91 // pred_region
          %s1581 = sand.u32 %s237, 1
          %s1582 = scalar_lea.sflag [#allocation14], %s1581
          %s1583 = sand.u32 %s237, 1
          %s1584 = smul.addr %s1583, 256
          %s1585 = scalar_lea.vmem [#allocation13], %s1584
          %1586 = dma.done %s1582, 4096
        $region96: #{tpu_custom_call.1} parent=91 // pred_fallthru
          _
      $region92: #{tpu_custom_call.1} parent=5 // pred_fallthru
        _
    $region6: #{tpu_custom_call.1} parent=1 // loop_footer
      %s28 = sadd.s32 1, %s24
    $region7: #{tpu_custom_call.1} parent=1 // loop_footer_branch
      %23 = sbr.rel target = $region3
    $region8: #{tpu_custom_call.1} parent=1 // loop_exit
      _
    %1587 = vsyncpa [#allocation4], 1
    %s1588 = scalar_lea.sflag [#allocation4], 1
    %1589 = vsyncpa %s1588, 1
    %1590 = vsyncpa [#allocation7], 1
    %1591 = vsyncpa [#allocation10], 1
    %1592 = vsyncpa [#allocation5], 1
    %s1593 = scalar_lea.sflag [#allocation5], 1
    %1594 = vsyncpa %s1593, 1
    %1595 = vsyncpa [#allocation14], 1
    %s1596 = scalar_lea.sflag [#allocation14], 1
    %1597 = vsyncpa %s1596, 1

</llo_original>
